<compile_context>
chip_gen: v7x
topology: tpu7x:2x2x1
jax: 0.10.0
libtpu: 0.0.40
codegen_flags: <defaults>
</compile_context>

<pallas_src>
import functools

import jax
import jax.numpy as jnp
from jax.experimental import pallas as pl
from jax.experimental.pallas import tpu as pltpu


# ----------------------------------------------------------------------------
# Pallas kernel: fused-gate LSTM recurrence + tanh + attention softmax + readout
# ----------------------------------------------------------------------------
def lstm_attention_kernel(state_ref, action_ref, wis_ref, wia_ref, whh_ref,
                          b_ref, attn_ref, wout_ref, bout_ref, out_ref):
    B, T, Sd = state_ref.shape
    Ad = action_ref.shape[2]
    H = whh_ref.shape[0]
    G = 4 * H                                            # gate-concatenated width

    # ---- hoisted input projection: one batched, lane-dense matmul ----------
    # x_all[b, t] = [state_t, action_t] @ W_ih + (b_ih + b_hh), shape (B, T, 4H)
    s2d = state_ref[...].reshape(B * T, Sd)
    a2d = action_ref[...].reshape(B * T, Ad)
    x_all = (jnp.dot(s2d, wis_ref[...], preferred_element_type=jnp.float32)
             + jnp.dot(a2d, wia_ref[...], preferred_element_type=jnp.float32)
             + b_ref[...])                               # (B*T, 4H)
    x_all = x_all.reshape(B, T, G)

    whh = whh_ref[...]                                   # (H, 4H)
    h = jnp.zeros((B, H), jnp.float32)
    c = jnp.zeros((B, H), jnp.float32)
    ms = []
    # T is small (<= ~32): static unroll is fine; the only matmul left on the
    # serial dependency chain is h @ W_hh.  (Switch to lax.fori_loop + scratch
    # if T ever grows large.)
    for t in range(T):
        gates = x_all[:, t, :] + jnp.dot(h, whh,
                                         preferred_element_type=jnp.float32)
        i_t = jax.nn.sigmoid(gates[:, 0:H])              # PyTorch gate order
        f_t = jax.nn.sigmoid(gates[:, H:2 * H])          # i, f, g, o
        g_t = jnp.tanh(gates[:, 2 * H:3 * H])
        o_t = jax.nn.sigmoid(gates[:, 3 * H:4 * H])
        c = f_t * c + i_t * g_t
        h = o_t * jnp.tanh(c)
        ms.append(jnp.tanh(h))                           # M_t, stays in vregs

    M = jnp.stack(ms, axis=0)                            # (T, B, H), register resident

    # ---- attention over the time axis (VPU/XLU/EUP epilogue) ---------------
    attn = attn_ref[...]                                 # (1, H)
    logits = jnp.sum(M * attn, axis=-1, keepdims=True)   # (T, B, 1) lane reduce
    logits = logits - jnp.max(logits, axis=0, keepdims=True)
    e = jnp.exp(logits)
    denom = jnp.sum(e, axis=0, keepdims=True)            # (1, B, 1)
    alpha = e * pl.reciprocal(denom, approx=False)       # exact recip keeps 1e-4 tol
    r = jnp.sum(alpha * M, axis=0)                       # (B, H)
    hh = jnp.tanh(r)
    # TODO(synk): nn.Dropout(0.1) is identity at inference time; not applied.
    out_ref[...] = (jnp.dot(hh, wout_ref[...], preferred_element_type=jnp.float32)
                    + bout_ref[...]).astype(out_ref.dtype)


# ----------------------------------------------------------------------------
# Wrapper: no concat / transpose glue — raw state/action go straight to VMEM
# ----------------------------------------------------------------------------
def lstm_attention_forward(state, action, params):
    B, T, Sd = state.shape
    Ad = action.shape[2]
    H = params["w_hh"].shape[0]
    G = 4 * H
    out_dim = params["w_out"].shape[1]

    state = state.astype(jnp.float32)
    action = action.astype(jnp.float32)
    args = (state, action, params["w_ih_s"], params["w_ih_a"], params["w_hh"],
            params["b"], params["attn"], params["w_out"], params["b_out"])

    # Advisory cost so XLA can schedule/overlap this tiny custom call.
    flops = (2 * B * T * (Sd + Ad + H) * G        # input proj + recurrence matmuls
             + 12 * B * T * H                     # gate/cell elementwise
             + 3 * B * T * H                      # attention weighted sum
             + 2 * B * H * out_dim)               # readout
    transcendentals = 6 * B * T * H + B * T + B * H
    bytes_accessed = sum(int(a.size) * a.dtype.itemsize for a in args) \
        + B * out_dim * 4

    vmem = functools.partial(pl.BlockSpec, memory_space=pltpu.MemorySpace.VMEM)
    # TODO(synk): at production batch sizes add a grid over B (blocks of >=8 rows)
    # with dimension_semantics=("parallel",) so v7x's two TensorCores split the
    # batch and per-TC VMEM stays under the 32 MiB default scoped limit.
    return pl.pallas_call(
        lstm_attention_kernel,
        out_shape=jax.ShapeDtypeStruct((B, out_dim), jnp.float32),
        in_specs=[vmem()] * len(args),
        out_specs=vmem(),
        cost_estimate=pl.CostEstimate(flops=flops,
                                      transcendentals=transcendentals,
                                      bytes_accessed=bytes_accessed),
    )(*args)


# ----------------------------------------------------------------------------
# Deterministic parameter init (mirrors nn.LSTM / nn.Linear / randn shapes),
# stored in the fused, kernel-friendly layout.
# ----------------------------------------------------------------------------
def init_params(key, state_dim, action_dim, hidden_size):
    feature_dim = state_dim + action_dim
    out_dim = state_dim - 1
    k = 1.0 / (hidden_size ** 0.5)
    keys = jax.random.split(key, 7)
    w_ih = jax.random.uniform(keys[0], (4 * hidden_size, feature_dim),
                              minval=-k, maxval=k, dtype=jnp.float32)
    w_hh = jax.random.uniform(keys[1], (4 * hidden_size, hidden_size),
                              minval=-k, maxval=k, dtype=jnp.float32)
    b_ih = jax.random.uniform(keys[2], (4 * hidden_size,), minval=-k, maxval=k,
                              dtype=jnp.float32)
    b_hh = jax.random.uniform(keys[3], (4 * hidden_size,), minval=-k, maxval=k,
                              dtype=jnp.float32)
    attn = jax.random.normal(keys[4], (hidden_size, 1), dtype=jnp.float32)
    w_lin = jax.random.uniform(keys[5], (out_dim, hidden_size),
                               minval=-k, maxval=k, dtype=jnp.float32)
    b_lin = jax.random.uniform(keys[6], (out_dim,), minval=-k, maxval=k,
                               dtype=jnp.float32)
    # (4H, F) -> (F, 4H): gates concatenated along the last (lane) dim,
    # then split into the state / action halves of the feature axis.
    w_ih_all = w_ih.T
    return dict(
        w_ih_s=w_ih_all[:state_dim, :],                  # (Sd, 4H)
        w_ih_a=w_ih_all[state_dim:, :],                  # (Ad, 4H)
        w_hh=w_hh.T,                                     # (H, 4H)
        b=(b_ih + b_hh).reshape(1, 4 * hidden_size),     # (1, 4H)
        attn=attn.reshape(1, hidden_size),               # (1, H)
        w_out=w_lin.T,                                   # (H, out_dim)
        b_out=b_lin.reshape(1, out_dim),                 # (1, out_dim)
    )


# ----------------------------------------------------------------------------
# Pure-JAX reference (same math, no Pallas) for correctness checking
# ----------------------------------------------------------------------------
def reference_forward(state, action, params):
    B, T, _ = state.shape
    H = params["w_hh"].shape[0]
    x = jnp.concatenate([state, action], axis=-1)
    w_ih = jnp.concatenate([params["w_ih_s"], params["w_ih_a"]], axis=0)  # (F,4H)
    h = jnp.zeros((B, H), jnp.float32)
    c = jnp.zeros((B, H), jnp.float32)
    Ms = []
    for t in range(T):
        gates = x[:, t, :] @ w_ih + h @ params["w_hh"] + params["b"]
        i_t = jax.nn.sigmoid(gates[:, :H])
        f_t = jax.nn.sigmoid(gates[:, H:2 * H])
        g_t = jnp.tanh(gates[:, 2 * H:3 * H])
        o_t = jax.nn.sigmoid(gates[:, 3 * H:])
        c = f_t * c + i_t * g_t
        h = o_t * jnp.tanh(c)
        Ms.append(jnp.tanh(h))
    M = jnp.stack(Ms, axis=1)                                          # (B, T, H)
    logits = jnp.einsum("bth,h->bt", M, params["attn"][0])
    alpha = jax.nn.softmax(logits, axis=-1)
    r = jnp.einsum("bt,bth->bh", alpha, M)
    hh = jnp.tanh(r)
    return hh @ params["w_out"] + params["b_out"]


if __name__ == "__main__":
    state_dim, action_dim, hidden_size = 6, 4, 32
    B, T = 2, 8

    root = jax.random.PRNGKey(0)
    pkey, skey, akey = jax.random.split(root, 3)
    params = init_params(pkey, state_dim, action_dim, hidden_size)
    state = jax.random.normal(skey, (B, T, state_dim), dtype=jnp.float32)
    action = jax.random.normal(akey, (B, T, action_dim), dtype=jnp.float32)

    out = jax.block_until_ready(lstm_attention_forward(state, action, params))
    ref = reference_forward(state, action, params)

    assert out.shape == (B, state_dim - 1), out.shape
    assert jnp.allclose(out, ref, atol=1e-4, rtol=1e-4), (out, ref)
    print("KERNEL_OK")
</pallas_src>

<mosaic_0001>
module attributes {stable_mosaic.version = 11 : i64} {
  func.func @lstm_attention_kernel(%arg0: memref<2x8x6xf32, #tpu.memory_space<vmem>>, %arg1: memref<2x8x4xf32, #tpu.memory_space<vmem>>, %arg2: memref<6x128xf32, #tpu.memory_space<vmem>>, %arg3: memref<4x128xf32, #tpu.memory_space<vmem>>, %arg4: memref<32x128xf32, #tpu.memory_space<vmem>>, %arg5: memref<1x128xf32, #tpu.memory_space<vmem>>, %arg6: memref<1x32xf32, #tpu.memory_space<vmem>>, %arg7: memref<32x5xf32, #tpu.memory_space<vmem>>, %arg8: memref<1x5xf32, #tpu.memory_space<vmem>>, %arg9: memref<2x5xf32, #tpu.memory_space<vmem>>) attributes {dimension_semantics = [], scalar_prefetch = 0 : i64, scratch_operands = 0 : i64, tpu.core_type = #tpu.core_type<tc>} {
    %c0 = arith.constant 0 : index
    %c0_0 = arith.constant 0 : index
    %c0_1 = arith.constant 0 : index
    %0 = vector.load %arg0[%c0, %c0_0, %c0_1] : memref<2x8x6xf32, #tpu.memory_space<vmem>>, vector<2x8x6xf32>
    %1 = vector.shape_cast %0 : vector<2x8x6xf32> to vector<16x6xf32>
    %c0_2 = arith.constant 0 : index
    %c0_3 = arith.constant 0 : index
    %c0_4 = arith.constant 0 : index
    %2 = vector.load %arg1[%c0_2, %c0_3, %c0_4] : memref<2x8x4xf32, #tpu.memory_space<vmem>>, vector<2x8x4xf32>
    %3 = vector.shape_cast %2 : vector<2x8x4xf32> to vector<16x4xf32>
    %c0_5 = arith.constant 0 : index
    %c0_6 = arith.constant 0 : index
    %4 = vector.load %arg2[%c0_5, %c0_6] : memref<6x128xf32, #tpu.memory_space<vmem>>, vector<6x128xf32>
    %cst = arith.constant dense<0.000000e+00> : vector<16x128xf32>
    %5 = tpu.matmul %1, %4, %cst {dimension_numbers = #tpu.dot_dimension_numbers<[1], [0], [0], [1], [0, 0, 1, 1], [], []>} : vector<16x6xf32>, vector<6x128xf32>, vector<16x128xf32> -> vector<16x128xf32>
    %c0_7 = arith.constant 0 : index
    %c0_8 = arith.constant 0 : index
    %6 = vector.load %arg3[%c0_7, %c0_8] : memref<4x128xf32, #tpu.memory_space<vmem>>, vector<4x128xf32>
    %cst_9 = arith.constant dense<0.000000e+00> : vector<16x128xf32>
    %7 = tpu.matmul %3, %6, %cst_9 {dimension_numbers = #tpu.dot_dimension_numbers<[1], [0], [0], [1], [0, 0, 1, 1], [], []>} : vector<16x4xf32>, vector<4x128xf32>, vector<16x128xf32> -> vector<16x128xf32>
    %8 = arith.addf %5, %7 : vector<16x128xf32>
    %c0_10 = arith.constant 0 : index
    %c0_11 = arith.constant 0 : index
    %9 = vector.load %arg5[%c0_10, %c0_11] : memref<1x128xf32, #tpu.memory_space<vmem>>, vector<1x128xf32>
    %10 = vector.broadcast %9 : vector<1x128xf32> to vector<16x128xf32>
    %11 = arith.addf %8, %10 : vector<16x128xf32>
    %12 = vector.shape_cast %11 : vector<16x128xf32> to vector<2x8x128xf32>
    %c0_12 = arith.constant 0 : index
    %c0_13 = arith.constant 0 : index
    %13 = vector.load %arg4[%c0_12, %c0_13] : memref<32x128xf32, #tpu.memory_space<vmem>>, vector<32x128xf32>
    %cst_14 = arith.constant 0.000000e+00 : f32
    %14 = vector.broadcast %cst_14 : f32 to vector<2x32xf32>
    %cst_15 = arith.constant 0.000000e+00 : f32
    %15 = vector.broadcast %cst_15 : f32 to vector<2x32xf32>
    %16 = vector.extract_strided_slice %12 {offsets = [0, 0, 0], sizes = [2, 1, 128], strides = [1, 1, 1]} : vector<2x8x128xf32> to vector<2x1x128xf32>
    %17 = vector.shape_cast %16 : vector<2x1x128xf32> to vector<2x128xf32>
    %cst_16 = arith.constant dense<0.000000e+00> : vector<2x128xf32>
    %18 = tpu.matmul %14, %13, %cst_16 {dimension_numbers = #tpu.dot_dimension_numbers<[1], [0], [0], [1], [0, 0, 1, 1], [], []>} : vector<2x32xf32>, vector<32x128xf32>, vector<2x128xf32> -> vector<2x128xf32>
    %19 = arith.addf %17, %18 : vector<2x128xf32>
    %20 = vector.extract_strided_slice %19 {offsets = [0, 0], sizes = [2, 32], strides = [1, 1]} : vector<2x128xf32> to vector<2x32xf32>
    %21 = arith.negf %20 : vector<2x32xf32>
    %22 = math.exp %21 : vector<2x32xf32>
    %cst_17 = arith.constant 1.000000e+00 : f32
    %23 = vector.broadcast %cst_17 : f32 to vector<2x32xf32>
    %24 = arith.addf %23, %22 : vector<2x32xf32>
    %25 = arith.divf %23, %24 : vector<2x32xf32>
    %26 = vector.extract_strided_slice %19 {offsets = [0, 32], sizes = [2, 32], strides = [1, 1]} : vector<2x128xf32> to vector<2x32xf32>
    %27 = arith.negf %26 : vector<2x32xf32>
    %28 = math.exp %27 : vector<2x32xf32>
    %cst_18 = arith.constant 1.000000e+00 : f32
    %29 = vector.broadcast %cst_18 : f32 to vector<2x32xf32>
    %30 = arith.addf %29, %28 : vector<2x32xf32>
    %31 = arith.divf %29, %30 : vector<2x32xf32>
    %32 = vector.extract_strided_slice %19 {offsets = [0, 64], sizes = [2, 32], strides = [1, 1]} : vector<2x128xf32> to vector<2x32xf32>
    %33 = math.tanh %32 : vector<2x32xf32>
    %34 = vector.extract_strided_slice %19 {offsets = [0, 96], sizes = [2, 32], strides = [1, 1]} : vector<2x128xf32> to vector<2x32xf32>
    %35 = arith.negf %34 : vector<2x32xf32>
    %36 = math.exp %35 : vector<2x32xf32>
    %cst_19 = arith.constant 1.000000e+00 : f32
    %37 = vector.broadcast %cst_19 : f32 to vector<2x32xf32>
    %38 = arith.addf %37, %36 : vector<2x32xf32>
    %39 = arith.divf %37, %38 : vector<2x32xf32>
    %40 = arith.mulf %31, %15 : vector<2x32xf32>
    %41 = arith.mulf %25, %33 : vector<2x32xf32>
    %42 = arith.addf %40, %41 : vector<2x32xf32>
    %43 = math.tanh %42 : vector<2x32xf32>
    %44 = arith.mulf %39, %43 : vector<2x32xf32>
    %45 = math.tanh %44 : vector<2x32xf32>
    %46 = vector.extract_strided_slice %12 {offsets = [0, 1, 0], sizes = [2, 1, 128], strides = [1, 1, 1]} : vector<2x8x128xf32> to vector<2x1x128xf32>
    %47 = vector.shape_cast %46 : vector<2x1x128xf32> to vector<2x128xf32>
    %cst_20 = arith.constant dense<0.000000e+00> : vector<2x128xf32>
    %48 = tpu.matmul %44, %13, %cst_20 {dimension_numbers = #tpu.dot_dimension_numbers<[1], [0], [0], [1], [0, 0, 1, 1], [], []>} : vector<2x32xf32>, vector<32x128xf32>, vector<2x128xf32> -> vector<2x128xf32>
    %49 = arith.addf %47, %48 : vector<2x128xf32>
    %50 = vector.extract_strided_slice %49 {offsets = [0, 0], sizes = [2, 32], strides = [1, 1]} : vector<2x128xf32> to vector<2x32xf32>
    %51 = arith.negf %50 : vector<2x32xf32>
    %52 = math.exp %51 : vector<2x32xf32>
    %cst_21 = arith.constant 1.000000e+00 : f32
    %53 = vector.broadcast %cst_21 : f32 to vector<2x32xf32>
    %54 = arith.addf %53, %52 : vector<2x32xf32>
    %55 = arith.divf %53, %54 : vector<2x32xf32>
    %56 = vector.extract_strided_slice %49 {offsets = [0, 32], sizes = [2, 32], strides = [1, 1]} : vector<2x128xf32> to vector<2x32xf32>
    %57 = arith.negf %56 : vector<2x32xf32>
    %58 = math.exp %57 : vector<2x32xf32>
    %cst_22 = arith.constant 1.000000e+00 : f32
    %59 = vector.broadcast %cst_22 : f32 to vector<2x32xf32>
    %60 = arith.addf %59, %58 : vector<2x32xf32>
    %61 = arith.divf %59, %60 : vector<2x32xf32>
    %62 = vector.extract_strided_slice %49 {offsets = [0, 64], sizes = [2, 32], strides = [1, 1]} : vector<2x128xf32> to vector<2x32xf32>
    %63 = math.tanh %62 : vector<2x32xf32>
    %64 = vector.extract_strided_slice %49 {offsets = [0, 96], sizes = [2, 32], strides = [1, 1]} : vector<2x128xf32> to vector<2x32xf32>
    %65 = arith.negf %64 : vector<2x32xf32>
    %66 = math.exp %65 : vector<2x32xf32>
    %cst_23 = arith.constant 1.000000e+00 : f32
    %67 = vector.broadcast %cst_23 : f32 to vector<2x32xf32>
    %68 = arith.addf %67, %66 : vector<2x32xf32>
    %69 = arith.divf %67, %68 : vector<2x32xf32>
    %70 = arith.mulf %61, %42 : vector<2x32xf32>
    %71 = arith.mulf %55, %63 : vector<2x32xf32>
    %72 = arith.addf %70, %71 : vector<2x32xf32>
    %73 = math.tanh %72 : vector<2x32xf32>
    %74 = arith.mulf %69, %73 : vector<2x32xf32>
    %75 = math.tanh %74 : vector<2x32xf32>
    %76 = vector.extract_strided_slice %12 {offsets = [0, 2, 0], sizes = [2, 1, 128], strides = [1, 1, 1]} : vector<2x8x128xf32> to vector<2x1x128xf32>
    %77 = vector.shape_cast %76 : vector<2x1x128xf32> to vector<2x128xf32>
    %cst_24 = arith.constant dense<0.000000e+00> : vector<2x128xf32>
    %78 = tpu.matmul %74, %13, %cst_24 {dimension_numbers = #tpu.dot_dimension_numbers<[1], [0], [0], [1], [0, 0, 1, 1], [], []>} : vector<2x32xf32>, vector<32x128xf32>, vector<2x128xf32> -> vector<2x128xf32>
    %79 = arith.addf %77, %78 : vector<2x128xf32>
    %80 = vector.extract_strided_slice %79 {offsets = [0, 0], sizes = [2, 32], strides = [1, 1]} : vector<2x128xf32> to vector<2x32xf32>
    %81 = arith.negf %80 : vector<2x32xf32>
    %82 = math.exp %81 : vector<2x32xf32>
    %cst_25 = arith.constant 1.000000e+00 : f32
    %83 = vector.broadcast %cst_25 : f32 to vector<2x32xf32>
    %84 = arith.addf %83, %82 : vector<2x32xf32>
    %85 = arith.divf %83, %84 : vector<2x32xf32>
    %86 = vector.extract_strided_slice %79 {offsets = [0, 32], sizes = [2, 32], strides = [1, 1]} : vector<2x128xf32> to vector<2x32xf32>
    %87 = arith.negf %86 : vector<2x32xf32>
    %88 = math.exp %87 : vector<2x32xf32>
    %cst_26 = arith.constant 1.000000e+00 : f32
    %89 = vector.broadcast %cst_26 : f32 to vector<2x32xf32>
    %90 = arith.addf %89, %88 : vector<2x32xf32>
    %91 = arith.divf %89, %90 : vector<2x32xf32>
    %92 = vector.extract_strided_slice %79 {offsets = [0, 64], sizes = [2, 32], strides = [1, 1]} : vector<2x128xf32> to vector<2x32xf32>
    %93 = math.tanh %92 : vector<2x32xf32>
    %94 = vector.extract_strided_slice %79 {offsets = [0, 96], sizes = [2, 32], strides = [1, 1]} : vector<2x128xf32> to vector<2x32xf32>
    %95 = arith.negf %94 : vector<2x32xf32>
    %96 = math.exp %95 : vector<2x32xf32>
    %cst_27 = arith.constant 1.000000e+00 : f32
    %97 = vector.broadcast %cst_27 : f32 to vector<2x32xf32>
    %98 = arith.addf %97, %96 : vector<2x32xf32>
    %99 = arith.divf %97, %98 : vector<2x32xf32>
    %100 = arith.mulf %91, %72 : vector<2x32xf32>
    %101 = arith.mulf %85, %93 : vector<2x32xf32>
    %102 = arith.addf %100, %101 : vector<2x32xf32>
    %103 = math.tanh %102 : vector<2x32xf32>
    %104 = arith.mulf %99, %103 : vector<2x32xf32>
    %105 = math.tanh %104 : vector<2x32xf32>
    %106 = vector.extract_strided_slice %12 {offsets = [0, 3, 0], sizes = [2, 1, 128], strides = [1, 1, 1]} : vector<2x8x128xf32> to vector<2x1x128xf32>
    %107 = vector.shape_cast %106 : vector<2x1x128xf32> to vector<2x128xf32>
    %cst_28 = arith.constant dense<0.000000e+00> : vector<2x128xf32>
    %108 = tpu.matmul %104, %13, %cst_28 {dimension_numbers = #tpu.dot_dimension_numbers<[1], [0], [0], [1], [0, 0, 1, 1], [], []>} : vector<2x32xf32>, vector<32x128xf32>, vector<2x128xf32> -> vector<2x128xf32>
    %109 = arith.addf %107, %108 : vector<2x128xf32>
    %110 = vector.extract_strided_slice %109 {offsets = [0, 0], sizes = [2, 32], strides = [1, 1]} : vector<2x128xf32> to vector<2x32xf32>
    %111 = arith.negf %110 : vector<2x32xf32>
    %112 = math.exp %111 : vector<2x32xf32>
    %cst_29 = arith.constant 1.000000e+00 : f32
    %113 = vector.broadcast %cst_29 : f32 to vector<2x32xf32>
    %114 = arith.addf %113, %112 : vector<2x32xf32>
    %115 = arith.divf %113, %114 : vector<2x32xf32>
    %116 = vector.extract_strided_slice %109 {offsets = [0, 32], sizes = [2, 32], strides = [1, 1]} : vector<2x128xf32> to vector<2x32xf32>
    %117 = arith.negf %116 : vector<2x32xf32>
    %118 = math.exp %117 : vector<2x32xf32>
    %cst_30 = arith.constant 1.000000e+00 : f32
    %119 = vector.broadcast %cst_30 : f32 to vector<2x32xf32>
    %120 = arith.addf %119, %118 : vector<2x32xf32>
    %121 = arith.divf %119, %120 : vector<2x32xf32>
    %122 = vector.extract_strided_slice %109 {offsets = [0, 64], sizes = [2, 32], strides = [1, 1]} : vector<2x128xf32> to vector<2x32xf32>
    %123 = math.tanh %122 : vector<2x32xf32>
    %124 = vector.extract_strided_slice %109 {offsets = [0, 96], sizes = [2, 32], strides = [1, 1]} : vector<2x128xf32> to vector<2x32xf32>
    %125 = arith.negf %124 : vector<2x32xf32>
    %126 = math.exp %125 : vector<2x32xf32>
    %cst_31 = arith.constant 1.000000e+00 : f32
    %127 = vector.broadcast %cst_31 : f32 to vector<2x32xf32>
    %128 = arith.addf %127, %126 : vector<2x32xf32>
    %129 = arith.divf %127, %128 : vector<2x32xf32>
    %130 = arith.mulf %121, %102 : vector<2x32xf32>
    %131 = arith.mulf %115, %123 : vector<2x32xf32>
    %132 = arith.addf %130, %131 : vector<2x32xf32>
    %133 = math.tanh %132 : vector<2x32xf32>
    %134 = arith.mulf %129, %133 : vector<2x32xf32>
    %135 = math.tanh %134 : vector<2x32xf32>
    %136 = vector.extract_strided_slice %12 {offsets = [0, 4, 0], sizes = [2, 1, 128], strides = [1, 1, 1]} : vector<2x8x128xf32> to vector<2x1x128xf32>
    %137 = vector.shape_cast %136 : vector<2x1x128xf32> to vector<2x128xf32>
    %cst_32 = arith.constant dense<0.000000e+00> : vector<2x128xf32>
    %138 = tpu.matmul %134, %13, %cst_32 {dimension_numbers = #tpu.dot_dimension_numbers<[1], [0], [0], [1], [0, 0, 1, 1], [], []>} : vector<2x32xf32>, vector<32x128xf32>, vector<2x128xf32> -> vector<2x128xf32>
    %139 = arith.addf %137, %138 : vector<2x128xf32>
    %140 = vector.extract_strided_slice %139 {offsets = [0, 0], sizes = [2, 32], strides = [1, 1]} : vector<2x128xf32> to vector<2x32xf32>
    %141 = arith.negf %140 : vector<2x32xf32>
    %142 = math.exp %141 : vector<2x32xf32>
    %cst_33 = arith.constant 1.000000e+00 : f32
    %143 = vector.broadcast %cst_33 : f32 to vector<2x32xf32>
    %144 = arith.addf %143, %142 : vector<2x32xf32>
    %145 = arith.divf %143, %144 : vector<2x32xf32>
    %146 = vector.extract_strided_slice %139 {offsets = [0, 32], sizes = [2, 32], strides = [1, 1]} : vector<2x128xf32> to vector<2x32xf32>
    %147 = arith.negf %146 : vector<2x32xf32>
    %148 = math.exp %147 : vector<2x32xf32>
    %cst_34 = arith.constant 1.000000e+00 : f32
    %149 = vector.broadcast %cst_34 : f32 to vector<2x32xf32>
    %150 = arith.addf %149, %148 : vector<2x32xf32>
    %151 = arith.divf %149, %150 : vector<2x32xf32>
    %152 = vector.extract_strided_slice %139 {offsets = [0, 64], sizes = [2, 32], strides = [1, 1]} : vector<2x128xf32> to vector<2x32xf32>
    %153 = math.tanh %152 : vector<2x32xf32>
    %154 = vector.extract_strided_slice %139 {offsets = [0, 96], sizes = [2, 32], strides = [1, 1]} : vector<2x128xf32> to vector<2x32xf32>
    %155 = arith.negf %154 : vector<2x32xf32>
    %156 = math.exp %155 : vector<2x32xf32>
    %cst_35 = arith.constant 1.000000e+00 : f32
    %157 = vector.broadcast %cst_35 : f32 to vector<2x32xf32>
    %158 = arith.addf %157, %156 : vector<2x32xf32>
    %159 = arith.divf %157, %158 : vector<2x32xf32>
    %160 = arith.mulf %151, %132 : vector<2x32xf32>
    %161 = arith.mulf %145, %153 : vector<2x32xf32>
    %162 = arith.addf %160, %161 : vector<2x32xf32>
    %163 = math.tanh %162 : vector<2x32xf32>
    %164 = arith.mulf %159, %163 : vector<2x32xf32>
    %165 = math.tanh %164 : vector<2x32xf32>
    %166 = vector.extract_strided_slice %12 {offsets = [0, 5, 0], sizes = [2, 1, 128], strides = [1, 1, 1]} : vector<2x8x128xf32> to vector<2x1x128xf32>
    %167 = vector.shape_cast %166 : vector<2x1x128xf32> to vector<2x128xf32>
    %cst_36 = arith.constant dense<0.000000e+00> : vector<2x128xf32>
    %168 = tpu.matmul %164, %13, %cst_36 {dimension_numbers = #tpu.dot_dimension_numbers<[1], [0], [0], [1], [0, 0, 1, 1], [], []>} : vector<2x32xf32>, vector<32x128xf32>, vector<2x128xf32> -> vector<2x128xf32>
    %169 = arith.addf %167, %168 : vector<2x128xf32>
    %170 = vector.extract_strided_slice %169 {offsets = [0, 0], sizes = [2, 32], strides = [1, 1]} : vector<2x128xf32> to vector<2x32xf32>
    %171 = arith.negf %170 : vector<2x32xf32>
    %172 = math.exp %171 : vector<2x32xf32>
    %cst_37 = arith.constant 1.000000e+00 : f32
    %173 = vector.broadcast %cst_37 : f32 to vector<2x32xf32>
    %174 = arith.addf %173, %172 : vector<2x32xf32>
    %175 = arith.divf %173, %174 : vector<2x32xf32>
    %176 = vector.extract_strided_slice %169 {offsets = [0, 32], sizes = [2, 32], strides = [1, 1]} : vector<2x128xf32> to vector<2x32xf32>
    %177 = arith.negf %176 : vector<2x32xf32>
    %178 = math.exp %177 : vector<2x32xf32>
    %cst_38 = arith.constant 1.000000e+00 : f32
    %179 = vector.broadcast %cst_38 : f32 to vector<2x32xf32>
    %180 = arith.addf %179, %178 : vector<2x32xf32>
    %181 = arith.divf %179, %180 : vector<2x32xf32>
    %182 = vector.extract_strided_slice %169 {offsets = [0, 64], sizes = [2, 32], strides = [1, 1]} : vector<2x128xf32> to vector<2x32xf32>
    %183 = math.tanh %182 : vector<2x32xf32>
    %184 = vector.extract_strided_slice %169 {offsets = [0, 96], sizes = [2, 32], strides = [1, 1]} : vector<2x128xf32> to vector<2x32xf32>
    %185 = arith.negf %184 : vector<2x32xf32>
    %186 = math.exp %185 : vector<2x32xf32>
    %cst_39 = arith.constant 1.000000e+00 : f32
    %187 = vector.broadcast %cst_39 : f32 to vector<2x32xf32>
    %188 = arith.addf %187, %186 : vector<2x32xf32>
    %189 = arith.divf %187, %188 : vector<2x32xf32>
    %190 = arith.mulf %181, %162 : vector<2x32xf32>
    %191 = arith.mulf %175, %183 : vector<2x32xf32>
    %192 = arith.addf %190, %191 : vector<2x32xf32>
    %193 = math.tanh %192 : vector<2x32xf32>
    %194 = arith.mulf %189, %193 : vector<2x32xf32>
    %195 = math.tanh %194 : vector<2x32xf32>
    %196 = vector.extract_strided_slice %12 {offsets = [0, 6, 0], sizes = [2, 1, 128], strides = [1, 1, 1]} : vector<2x8x128xf32> to vector<2x1x128xf32>
    %197 = vector.shape_cast %196 : vector<2x1x128xf32> to vector<2x128xf32>
    %cst_40 = arith.constant dense<0.000000e+00> : vector<2x128xf32>
    %198 = tpu.matmul %194, %13, %cst_40 {dimension_numbers = #tpu.dot_dimension_numbers<[1], [0], [0], [1], [0, 0, 1, 1], [], []>} : vector<2x32xf32>, vector<32x128xf32>, vector<2x128xf32> -> vector<2x128xf32>
    %199 = arith.addf %197, %198 : vector<2x128xf32>
    %200 = vector.extract_strided_slice %199 {offsets = [0, 0], sizes = [2, 32], strides = [1, 1]} : vector<2x128xf32> to vector<2x32xf32>
    %201 = arith.negf %200 : vector<2x32xf32>
    %202 = math.exp %201 : vector<2x32xf32>
    %cst_41 = arith.constant 1.000000e+00 : f32
    %203 = vector.broadcast %cst_41 : f32 to vector<2x32xf32>
    %204 = arith.addf %203, %202 : vector<2x32xf32>
    %205 = arith.divf %203, %204 : vector<2x32xf32>
    %206 = vector.extract_strided_slice %199 {offsets = [0, 32], sizes = [2, 32], strides = [1, 1]} : vector<2x128xf32> to vector<2x32xf32>
    %207 = arith.negf %206 : vector<2x32xf32>
    %208 = math.exp %207 : vector<2x32xf32>
    %cst_42 = arith.constant 1.000000e+00 : f32
    %209 = vector.broadcast %cst_42 : f32 to vector<2x32xf32>
    %210 = arith.addf %209, %208 : vector<2x32xf32>
    %211 = arith.divf %209, %210 : vector<2x32xf32>
    %212 = vector.extract_strided_slice %199 {offsets = [0, 64], sizes = [2, 32], strides = [1, 1]} : vector<2x128xf32> to vector<2x32xf32>
    %213 = math.tanh %212 : vector<2x32xf32>
    %214 = vector.extract_strided_slice %199 {offsets = [0, 96], sizes = [2, 32], strides = [1, 1]} : vector<2x128xf32> to vector<2x32xf32>
    %215 = arith.negf %214 : vector<2x32xf32>
    %216 = math.exp %215 : vector<2x32xf32>
    %cst_43 = arith.constant 1.000000e+00 : f32
    %217 = vector.broadcast %cst_43 : f32 to vector<2x32xf32>
    %218 = arith.addf %217, %216 : vector<2x32xf32>
    %219 = arith.divf %217, %218 : vector<2x32xf32>
    %220 = arith.mulf %211, %192 : vector<2x32xf32>
    %221 = arith.mulf %205, %213 : vector<2x32xf32>
    %222 = arith.addf %220, %221 : vector<2x32xf32>
    %223 = math.tanh %222 : vector<2x32xf32>
    %224 = arith.mulf %219, %223 : vector<2x32xf32>
    %225 = math.tanh %224 : vector<2x32xf32>
    %226 = vector.extract_strided_slice %12 {offsets = [0, 7, 0], sizes = [2, 1, 128], strides = [1, 1, 1]} : vector<2x8x128xf32> to vector<2x1x128xf32>
    %227 = vector.shape_cast %226 : vector<2x1x128xf32> to vector<2x128xf32>
    %cst_44 = arith.constant dense<0.000000e+00> : vector<2x128xf32>
    %228 = tpu.matmul %224, %13, %cst_44 {dimension_numbers = #tpu.dot_dimension_numbers<[1], [0], [0], [1], [0, 0, 1, 1], [], []>} : vector<2x32xf32>, vector<32x128xf32>, vector<2x128xf32> -> vector<2x128xf32>
    %229 = arith.addf %227, %228 : vector<2x128xf32>
    %230 = vector.extract_strided_slice %229 {offsets = [0, 0], sizes = [2, 32], strides = [1, 1]} : vector<2x128xf32> to vector<2x32xf32>
    %231 = arith.negf %230 : vector<2x32xf32>
    %232 = math.exp %231 : vector<2x32xf32>
    %cst_45 = arith.constant 1.000000e+00 : f32
    %233 = vector.broadcast %cst_45 : f32 to vector<2x32xf32>
    %234 = arith.addf %233, %232 : vector<2x32xf32>
    %235 = arith.divf %233, %234 : vector<2x32xf32>
    %236 = vector.extract_strided_slice %229 {offsets = [0, 32], sizes = [2, 32], strides = [1, 1]} : vector<2x128xf32> to vector<2x32xf32>
    %237 = arith.negf %236 : vector<2x32xf32>
    %238 = math.exp %237 : vector<2x32xf32>
    %cst_46 = arith.constant 1.000000e+00 : f32
    %239 = vector.broadcast %cst_46 : f32 to vector<2x32xf32>
    %240 = arith.addf %239, %238 : vector<2x32xf32>
    %241 = arith.divf %239, %240 : vector<2x32xf32>
    %242 = vector.extract_strided_slice %229 {offsets = [0, 64], sizes = [2, 32], strides = [1, 1]} : vector<2x128xf32> to vector<2x32xf32>
    %243 = math.tanh %242 : vector<2x32xf32>
    %244 = vector.extract_strided_slice %229 {offsets = [0, 96], sizes = [2, 32], strides = [1, 1]} : vector<2x128xf32> to vector<2x32xf32>
    %245 = arith.negf %244 : vector<2x32xf32>
    %246 = math.exp %245 : vector<2x32xf32>
    %cst_47 = arith.constant 1.000000e+00 : f32
    %247 = vector.broadcast %cst_47 : f32 to vector<2x32xf32>
    %248 = arith.addf %247, %246 : vector<2x32xf32>
    %249 = arith.divf %247, %248 : vector<2x32xf32>
    %250 = arith.mulf %241, %222 : vector<2x32xf32>
    %251 = arith.mulf %235, %243 : vector<2x32xf32>
    %252 = arith.addf %250, %251 : vector<2x32xf32>
    %253 = math.tanh %252 : vector<2x32xf32>
    %254 = arith.mulf %249, %253 : vector<2x32xf32>
    %255 = math.tanh %254 : vector<2x32xf32>
    %256 = vector.shape_cast %45 : vector<2x32xf32> to vector<1x2x32xf32>
    %257 = vector.shape_cast %75 : vector<2x32xf32> to vector<1x2x32xf32>
    %258 = vector.shape_cast %105 : vector<2x32xf32> to vector<1x2x32xf32>
    %259 = vector.shape_cast %135 : vector<2x32xf32> to vector<1x2x32xf32>
    %260 = vector.shape_cast %165 : vector<2x32xf32> to vector<1x2x32xf32>
    %261 = vector.shape_cast %195 : vector<2x32xf32> to vector<1x2x32xf32>
    %262 = vector.shape_cast %225 : vector<2x32xf32> to vector<1x2x32xf32>
    %263 = vector.shape_cast %255 : vector<2x32xf32> to vector<1x2x32xf32>
    %264 = tpu.concatenate %256, %257, %258, %259, %260, %261, %262, %263 in 0 : vector<1x2x32xf32>, vector<1x2x32xf32>, vector<1x2x32xf32>, vector<1x2x32xf32>, vector<1x2x32xf32>, vector<1x2x32xf32>, vector<1x2x32xf32>, vector<1x2x32xf32> -> vector<8x2x32xf32>
    %c0_48 = arith.constant 0 : index
    %c0_49 = arith.constant 0 : index
    %265 = vector.load %arg6[%c0_48, %c0_49] : memref<1x32xf32, #tpu.memory_space<vmem>>, vector<1x32xf32>
    %266 = vector.shape_cast %265 : vector<1x32xf32> to vector<1x1x32xf32>
    %267 = vector.broadcast %266 : vector<1x1x32xf32> to vector<8x2x32xf32>
    %268 = arith.mulf %264, %267 : vector<8x2x32xf32>
    %cst_50 = arith.constant dense<0.000000e+00> : vector<8x2xf32>
    %269 = vector.multi_reduction <add>, %268, %cst_50 [2] : vector<8x2x32xf32> to vector<8x2xf32>
    %270 = vector.shape_cast %269 : vector<8x2xf32> to vector<8x2x1xf32>
    %cst_51 = arith.constant dense<0xFF800000> : vector<2x1xf32>
    %271 = vector.multi_reduction <maximumf>, %270, %cst_51 [0] : vector<8x2x1xf32> to vector<2x1xf32>
    %272 = vector.shape_cast %271 : vector<2x1xf32> to vector<1x2x1xf32>
    %273 = vector.broadcast %272 : vector<1x2x1xf32> to vector<8x2x1xf32>
    %274 = arith.subf %270, %273 : vector<8x2x1xf32>
    %275 = math.exp %274 : vector<8x2x1xf32>
    %cst_52 = arith.constant dense<0.000000e+00> : vector<2x1xf32>
    %276 = vector.multi_reduction <add>, %275, %cst_52 [0] : vector<8x2x1xf32> to vector<2x1xf32>
    %277 = vector.shape_cast %276 : vector<2x1xf32> to vector<1x2x1xf32>
    %278 = tpu.reciprocal %277 : vector<1x2x1xf32> -> vector<1x2x1xf32>
    %279 = vector.broadcast %278 : vector<1x2x1xf32> to vector<8x2x1xf32>
    %280 = arith.mulf %275, %279 : vector<8x2x1xf32>
    %281 = vector.broadcast %280 : vector<8x2x1xf32> to vector<8x2x32xf32>
    %282 = arith.mulf %281, %264 : vector<8x2x32xf32>
    %cst_53 = arith.constant dense<0.000000e+00> : vector<2x32xf32>
    %283 = vector.multi_reduction <add>, %282, %cst_53 [0] : vector<8x2x32xf32> to vector<2x32xf32>
    %284 = math.tanh %283 : vector<2x32xf32>
    %c0_54 = arith.constant 0 : index
    %c0_55 = arith.constant 0 : index
    %285 = vector.load %arg7[%c0_54, %c0_55] : memref<32x5xf32, #tpu.memory_space<vmem>>, vector<32x5xf32>
    %cst_56 = arith.constant dense<0.000000e+00> : vector<2x5xf32>
    %286 = tpu.matmul %284, %285, %cst_56 {dimension_numbers = #tpu.dot_dimension_numbers<[1], [0], [0], [1], [0, 0, 1, 1], [], []>} : vector<2x32xf32>, vector<32x5xf32>, vector<2x5xf32> -> vector<2x5xf32>
    %c0_57 = arith.constant 0 : index
    %c0_58 = arith.constant 0 : index
    %287 = vector.load %arg8[%c0_57, %c0_58] : memref<1x5xf32, #tpu.memory_space<vmem>>, vector<1x5xf32>
    %288 = vector.broadcast %287 : vector<1x5xf32> to vector<2x5xf32>
    %289 = arith.addf %286, %288 : vector<2x5xf32>
    %c0_59 = arith.constant 0 : index
    %c0_60 = arith.constant 0 : index
    %290 = vector.load %arg9[%c0_59, %c0_60] : memref<2x5xf32, #tpu.memory_space<vmem>>, vector<2x5xf32>
    tpu.vector_store %arg9[%c0_59, %c0_60], %289 {strides = array<i32>} : memref<2x5xf32, #tpu.memory_space<vmem>>, vector<2x5xf32>,
    return
  }
}

</mosaic_0001>

<llo_original>
// kernel: tpu_custom_call.1
$region0: #{tpu_custom_call.1}
  #allocation0 [shape = 'u32[]', space=smem, size = 0x4, offset = 0x4, fixed_abs, tag = 'smem constant byte address 0x4 - core index']
  #allocation1 [shape = 'u32[144,128]{1,0:T(1,128)}', space=vmem, size = 0x12000, scoped, tag = 'internal scratch']
  %s0 = inlined_call_operand.vmem [shape: f32[2,8,6], index: 0, kind: input, shape index: {}]
  %s1 = inlined_call_operand.vmem [shape: f32[2,8,4], index: 1, kind: input, shape index: {}]
  %s2 = inlined_call_operand.vmem [shape: f32[6,128], index: 2, kind: input, shape index: {}]
  %s3 = inlined_call_operand.vmem [shape: f32[4,128], index: 3, kind: input, shape index: {}]
  %s4 = inlined_call_operand.vmem [shape: f32[32,128], index: 4, kind: input, shape index: {}]
  %s5 = inlined_call_operand.vmem [shape: f32[1,128], index: 5, kind: input, shape index: {}]
  %s6 = inlined_call_operand.vmem [shape: f32[1,32], index: 6, kind: input, shape index: {}]
  %s7 = inlined_call_operand.vmem [shape: f32[32,5], index: 7, kind: input, shape index: {}]
  %s8 = inlined_call_operand.vmem [shape: f32[1,5], index: 8, kind: input, shape index: {}]
  %s9 = inlined_call_operand.hbm [shape: f32[2,5], index: 9, kind: output, shape index: {}]
  %s10 = sld [smem:[#allocation0]]
  $region46: #{tpu_custom_call.1} parent=0
    _
  %s12 = ssub.s32 1, %s10
  %s13 = scalar_select 0, %s12, %s10
  $region1: #{tpu_custom_call.1} parent=0
    #allocation2 [shape = 'u8[1024]{0}', space=vmem, size = 0x400, scoped, tag = 'output window, operand 0, single buffered']
    #allocation3 [shape = 's32[1]{0}', space=sflag, size = 0x4, scoped, tag = 'scoped memory for tpu_custom_call.1']
    %14 = vsyncpa [#allocation3], 0
    // Predicated region
    $region2: #{tpu_custom_call.1} parent=1 // pred_check
      _
    $region3: #{tpu_custom_call.1} parent=1 // pred_check_branch
      %16 = sbr.rel (0) target = $region5
    $region4: #{tpu_custom_call.1} parent=1 // pred_region
      _
    $region5: #{tpu_custom_call.1} parent=1 // pred_fallthru
      _
    // Predicated region
    $region6: #{tpu_custom_call.1} parent=1 // pred_check
      _
    $region7: #{tpu_custom_call.1} parent=1 // pred_check_branch
      %18 = sbr.rel (0) target = $region9
    $region8: #{tpu_custom_call.1} parent=1 // pred_region
      _
    $region9: #{tpu_custom_call.1} parent=1 // pred_fallthru
      _
    // Predicated region
    $region10: #{tpu_custom_call.1} parent=1 // pred_check
      _
    $region11: #{tpu_custom_call.1} parent=1 // pred_check_branch
      %20 = sbr.rel (0) target = $region13
    $region12: #{tpu_custom_call.1} parent=1 // pred_region
      _
    $region13: #{tpu_custom_call.1} parent=1 // pred_fallthru
      _
    // Predicated region
    $region14: #{tpu_custom_call.1} parent=1 // pred_check
      _
    $region15: #{tpu_custom_call.1} parent=1 // pred_check_branch
      %22 = sbr.rel (0) target = $region17
    $region16: #{tpu_custom_call.1} parent=1 // pred_region
      _
    $region17: #{tpu_custom_call.1} parent=1 // pred_fallthru
      _
    // Predicated region
    $region18: #{tpu_custom_call.1} parent=1 // pred_check
      _
    $region19: #{tpu_custom_call.1} parent=1 // pred_check_branch
      %24 = sbr.rel (0) target = $region21
    $region20: #{tpu_custom_call.1} parent=1 // pred_region
      _
    $region21: #{tpu_custom_call.1} parent=1 // pred_fallthru
      _
    // Predicated region
    $region22: #{tpu_custom_call.1} parent=1 // pred_check
      _
    $region23: #{tpu_custom_call.1} parent=1 // pred_check_branch
      %26 = sbr.rel (0) target = $region25
    $region24: #{tpu_custom_call.1} parent=1 // pred_region
      _
    $region25: #{tpu_custom_call.1} parent=1 // pred_fallthru
      _
    // Predicated region
    $region26: #{tpu_custom_call.1} parent=1 // pred_check
      _
    $region27: #{tpu_custom_call.1} parent=1 // pred_check_branch
      %28 = sbr.rel (0) target = $region29
    $region28: #{tpu_custom_call.1} parent=1 // pred_region
      _
    $region29: #{tpu_custom_call.1} parent=1 // pred_fallthru
      _
    // Predicated region
    $region30: #{tpu_custom_call.1} parent=1 // pred_check
      _
    $region31: #{tpu_custom_call.1} parent=1 // pred_check_branch
      %30 = sbr.rel (0) target = $region33
    $region32: #{tpu_custom_call.1} parent=1 // pred_region
      _
    $region33: #{tpu_custom_call.1} parent=1 // pred_fallthru
      _
    // Predicated region
    $region34: #{tpu_custom_call.1} parent=1 // pred_check
      _
    $region35: #{tpu_custom_call.1} parent=1 // pred_check_branch
      %32 = sbr.rel (0) target = $region37
    $region36: #{tpu_custom_call.1} parent=1 // pred_region
      _
    $region37: #{tpu_custom_call.1} parent=1 // pred_fallthru
      _
    %v33 = vld [vmem:[%s0] sm:$0xff]
    %v34 = vld [vmem:[%s0 + $0x8] sm:$0xff]
    %v35 = vld [vmem:[%s1] sm:$0xff]
    %v36 = vld [vmem:[%s1 + $0x8] sm:$0xff]
    %v37 = vld [vmem:[%s2] sm:$0x3f]
    %v38 = vld [vmem:[%s3] sm:$0xf]
    %vm39 = vcmask 31744
    %v41 = vsel %vm39, %v35, 0
    %v44 = vsel %vm39, %v36, 0
    %vm46 = vcmask 1043456
    %v48 = vsel %vm46, %v38, 0
    %50 = vmatprep.subr.mxu0 0.0
    %51 = vmatpush1.msra.mxu0 %v48
    %52 = vmatprep.subr.mxu0 0.0
    %53 = vmatpush1.msra.mxu0 0.0
    %54 = vmatprep.subr.mxu0 0.0
    %55 = vmatpush1.msra.mxu0 0.0
    %56 = vmatprep.subr.mxu0 0.0
    %57 = vmatpush1.msra.mxu0 0.0
    %58 = vmatprep.subr.mxu0 0.0
    %59 = vmatpush1.msra.mxu0 0.0
    %60 = vmatprep.subr.mxu0 0.0
    %61 = vmatpush1.msra.mxu0 0.0
    %62 = vmatprep.subr.mxu0 0.0
    %63 = vmatpush1.msra.mxu0 0.0
    %64 = vmatprep.subr.mxu0 0.0
    %65 = vmatpush1.msra.mxu0 0.0
    %66 = vmatprep.subr.mxu0 0.0
    %67 = vmatpush1.msra.mxu0 0.0
    %68 = vmatprep.subr.mxu0 0.0
    %69 = vmatpush1.msra.mxu0 0.0
    %70 = vmatprep.subr.mxu0 0.0
    %71 = vmatpush1.msra.mxu0 0.0
    %72 = vmatprep.subr.mxu0 0.0
    %73 = vmatpush1.msra.mxu0 0.0
    %74 = vmatprep.subr.mxu0 0.0
    %75 = vmatpush1.msra.mxu0 0.0
    %76 = vmatprep.subr.mxu0 0.0
    %77 = vmatpush1.msra.mxu0 0.0
    %78 = vmatprep.subr.mxu0 0.0
    %79 = vmatpush1.msra.mxu0 0.0
    %80 = vmatprep.subr.mxu0 0.0
    %81 = vmatpush1.msra.mxu0 0.0
    %82 = vmatprep.subr.mxu0 0.0
    %83 = vmatpush1.msra.mxu0 0.0
    %84 = vmatprep.subr.mxu0 0.0
    %85 = vmatpush1.msra.mxu0 0.0
    %86 = vmatprep.subr.mxu0 0.0
    %87 = vmatpush1.msra.mxu0 0.0
    %88 = vmatprep.subr.mxu0 0.0
    %89 = vmatpush1.msra.mxu0 0.0
    %90 = vmatprep.subr.mxu0 0.0
    %91 = vmatpush1.msra.mxu0 0.0
    %92 = vmatprep.subr.mxu0 0.0
    %93 = vmatpush1.msra.mxu0 0.0
    %94 = vmatprep.subr.mxu0 0.0
    %95 = vmatpush1.msra.mxu0 0.0
    %96 = vmatprep.subr.mxu0 0.0
    %97 = vmatpush1.msra.mxu0 0.0
    %98 = vmatprep.subr.mxu0 0.0
    %99 = vmatpush1.msra.mxu0 0.0
    %100 = vmatprep.subr.mxu0 0.0
    %101 = vmatpush1.msra.mxu0 0.0
    %102 = vmatprep.subr.mxu0 0.0
    %103 = vmatpush1.msra.mxu0 0.0
    %104 = vmatprep.subr.mxu0 0.0
    %105 = vmatpush1.msra.mxu0 0.0
    %106 = vmatprep.subr.mxu0 0.0
    %107 = vmatpush1.msra.mxu0 0.0
    %108 = vmatprep.subr.mxu0 0.0
    %109 = vmatpush1.msra.mxu0 0.0
    %110 = vmatprep.subr.mxu0 0.0
    %111 = vmatpush1.msra.mxu0 0.0
    %112 = vmatprep.subr.mxu0 0.0
    %113 = vmatpush1.msra.mxu0 0.0
    %114 = vmatprep.mubr.f32.mxu0 0.0
    %115 = vmatmul.mubr.f32.gmra.mrb[0].mxu0 %v41
    %v116 = vpop.f32.mrb[0].mxu0
    %v117 = vadd.f32 0.0, %v116
    %v118 = vpop.f32.mrb[0].mxu0
    %119 = vmatprep.mubr.f32.mxu0 0.0
    %120 = vmatmul.mubr.f32.gmra.mrb[0].mxu0 %v44
    %v121 = vpop.f32.mrb[0].mxu0
    %v122 = vadd.f32 0.0, %v121
    %v123 = vpop.f32.mrb[0].mxu0
    %124 = vdwg.mxu0
    %vm125 = vcmask 48128
    %v127 = vsel %vm125, %v33, 0
    %v130 = vsel %vm125, %v34, 0
    %vm132 = vcmask 1045504
    %v134 = vsel %vm132, %v37, 0
    %136 = vmatprep.subr.mxu0 0.0
    %137 = vmatpush1.msra.mxu0 %v134
    %138 = vmatprep.subr.mxu0 0.0
    %139 = vmatpush1.msra.mxu0 0.0
    %140 = vmatprep.subr.mxu0 0.0
    %141 = vmatpush1.msra.mxu0 0.0
    %142 = vmatprep.subr.mxu0 0.0
    %143 = vmatpush1.msra.mxu0 0.0
    %144 = vmatprep.subr.mxu0 0.0
    %145 = vmatpush1.msra.mxu0 0.0
    %146 = vmatprep.subr.mxu0 0.0
    %147 = vmatpush1.msra.mxu0 0.0
    %148 = vmatprep.subr.mxu0 0.0
    %149 = vmatpush1.msra.mxu0 0.0
    %150 = vmatprep.subr.mxu0 0.0
    %151 = vmatpush1.msra.mxu0 0.0
    %152 = vmatprep.subr.mxu0 0.0
    %153 = vmatpush1.msra.mxu0 0.0
    %154 = vmatprep.subr.mxu0 0.0
    %155 = vmatpush1.msra.mxu0 0.0
    %156 = vmatprep.subr.mxu0 0.0
    %157 = vmatpush1.msra.mxu0 0.0
    %158 = vmatprep.subr.mxu0 0.0
    %159 = vmatpush1.msra.mxu0 0.0
    %160 = vmatprep.subr.mxu0 0.0
    %161 = vmatpush1.msra.mxu0 0.0
    %162 = vmatprep.subr.mxu0 0.0
    %163 = vmatpush1.msra.mxu0 0.0
    %164 = vmatprep.subr.mxu0 0.0
    %165 = vmatpush1.msra.mxu0 0.0
    %166 = vmatprep.subr.mxu0 0.0
    %167 = vmatpush1.msra.mxu0 0.0
    %168 = vmatprep.subr.mxu0 0.0
    %169 = vmatpush1.msra.mxu0 0.0
    %170 = vmatprep.subr.mxu0 0.0
    %171 = vmatpush1.msra.mxu0 0.0
    %172 = vmatprep.subr.mxu0 0.0
    %173 = vmatpush1.msra.mxu0 0.0
    %174 = vmatprep.subr.mxu0 0.0
    %175 = vmatpush1.msra.mxu0 0.0
    %176 = vmatprep.subr.mxu0 0.0
    %177 = vmatpush1.msra.mxu0 0.0
    %178 = vmatprep.subr.mxu0 0.0
    %179 = vmatpush1.msra.mxu0 0.0
    %180 = vmatprep.subr.mxu0 0.0
    %181 = vmatpush1.msra.mxu0 0.0
    %182 = vmatprep.subr.mxu0 0.0
    %183 = vmatpush1.msra.mxu0 0.0
    %184 = vmatprep.subr.mxu0 0.0
    %185 = vmatpush1.msra.mxu0 0.0
    %186 = vmatprep.subr.mxu0 0.0
    %187 = vmatpush1.msra.mxu0 0.0
    %188 = vmatprep.subr.mxu0 0.0
    %189 = vmatpush1.msra.mxu0 0.0
    %190 = vmatprep.subr.mxu0 0.0
    %191 = vmatpush1.msra.mxu0 0.0
    %192 = vmatprep.subr.mxu0 0.0
    %193 = vmatpush1.msra.mxu0 0.0
    %194 = vmatprep.subr.mxu0 0.0
    %195 = vmatpush1.msra.mxu0 0.0
    %196 = vmatprep.subr.mxu0 0.0
    %197 = vmatpush1.msra.mxu0 0.0
    %198 = vmatprep.subr.mxu0 0.0
    %199 = vmatpush1.msra.mxu0 0.0
    %200 = vmatprep.mubr.f32.mxu0 0.0
    %201 = vmatmul.mubr.f32.gmra.mrb[0].mxu0 %v127
    %v202 = vpop.f32.mrb[0].mxu0
    %v203 = vadd.f32 %v117, %v202
    %v204 = vpop.f32.mrb[0].mxu0
    %205 = vmatprep.mubr.f32.mxu0 0.0
    %206 = vmatmul.mubr.f32.gmra.mrb[0].mxu0 %v130
    %v207 = vpop.f32.mrb[0].mxu0
    %v208 = vadd.f32 %v122, %v207
    %v209 = vpop.f32.mrb[0].mxu0
    %210 = vdwg.mxu0
    %v211 = vld [vmem:[%s5] sm:$0x1]
    %v213 = vlaneseq
    %v214 = vshrl.u32 %v213, 7
    %v215 = vsub.s32 0, %v214
    %v216 = vrot.slane %v211, %v215
    %v218 = vadd.f32 %v203, %v216
    %v219 = vadd.f32 %v208, %v216
    %v220 = vld [vmem:[%s4] sm:$0xff]
    %v221 = vld [vmem:[%s4 + $0x8] sm:$0xff]
    %v222 = vld [vmem:[%s4 + $0x10] sm:$0xff]
    %v223 = vld [vmem:[%s4 + $0x18] sm:$0xff]
    %vm224 = vcmask 261120
    %v226 = vsel %vm224, 0.0, 0
    %228 = vmatprep.subr.mxu0 0.0
    %229 = vmatpush1.msra.mxu0 %v220
    %230 = vmatprep.subr.mxu0 0.0
    %231 = vmatpush1.msra.mxu0 %v221
    %232 = vmatprep.subr.mxu0 0.0
    %233 = vmatpush1.msra.mxu0 %v222
    %234 = vmatprep.subr.mxu0 0.0
    %235 = vmatpush1.msra.mxu0 %v223
    %236 = vmatprep.subr.mxu0 0.0
    %237 = vmatpush1.msra.mxu0 0.0
    %238 = vmatprep.subr.mxu0 0.0
    %239 = vmatpush1.msra.mxu0 0.0
    %240 = vmatprep.subr.mxu0 0.0
    %241 = vmatpush1.msra.mxu0 0.0
    %242 = vmatprep.subr.mxu0 0.0
    %243 = vmatpush1.msra.mxu0 0.0
    %244 = vmatprep.subr.mxu0 0.0
    %245 = vmatpush1.msra.mxu0 0.0
    %246 = vmatprep.subr.mxu0 0.0
    %247 = vmatpush1.msra.mxu0 0.0
    %248 = vmatprep.subr.mxu0 0.0
    %249 = vmatpush1.msra.mxu0 0.0
    %250 = vmatprep.subr.mxu0 0.0
    %251 = vmatpush1.msra.mxu0 0.0
    %252 = vmatprep.subr.mxu0 0.0
    %253 = vmatpush1.msra.mxu0 0.0
    %254 = vmatprep.subr.mxu0 0.0
    %255 = vmatpush1.msra.mxu0 0.0
    %256 = vmatprep.subr.mxu0 0.0
    %257 = vmatpush1.msra.mxu0 0.0
    %258 = vmatprep.subr.mxu0 0.0
    %259 = vmatpush1.msra.mxu0 0.0
    %260 = vmatprep.subr.mxu0 0.0
    %261 = vmatpush1.msra.mxu0 0.0
    %262 = vmatprep.subr.mxu0 0.0
    %263 = vmatpush1.msra.mxu0 0.0
    %264 = vmatprep.subr.mxu0 0.0
    %265 = vmatpush1.msra.mxu0 0.0
    %266 = vmatprep.subr.mxu0 0.0
    %267 = vmatpush1.msra.mxu0 0.0
    %268 = vmatprep.subr.mxu0 0.0
    %269 = vmatpush1.msra.mxu0 0.0
    %270 = vmatprep.subr.mxu0 0.0
    %271 = vmatpush1.msra.mxu0 0.0
    %272 = vmatprep.subr.mxu0 0.0
    %273 = vmatpush1.msra.mxu0 0.0
    %274 = vmatprep.subr.mxu0 0.0
    %275 = vmatpush1.msra.mxu0 0.0
    %276 = vmatprep.subr.mxu0 0.0
    %277 = vmatpush1.msra.mxu0 0.0
    %278 = vmatprep.subr.mxu0 0.0
    %279 = vmatpush1.msra.mxu0 0.0
    %280 = vmatprep.subr.mxu0 0.0
    %281 = vmatpush1.msra.mxu0 0.0
    %282 = vmatprep.subr.mxu0 0.0
    %283 = vmatpush1.msra.mxu0 0.0
    %284 = vmatprep.subr.mxu0 0.0
    %285 = vmatpush1.msra.mxu0 0.0
    %286 = vmatprep.subr.mxu0 0.0
    %287 = vmatpush1.msra.mxu0 0.0
    %288 = vmatprep.subr.mxu0 0.0
    %289 = vmatpush1.msra.mxu0 0.0
    %290 = vmatprep.subr.mxu0 0.0
    %291 = vmatpush1.msra.mxu0 0.0
    %292 = vmatprep.mubr.f32.mxu0 0.0
    %293 = vmatmul.mubr.f32.gmra.mrb[0].mxu0 %v226
    %v294 = vpop.f32.mrb[0].mxu0
    %v295 = vadd.f32 0.0, %v294
    %v296 = vpop.f32.mrb[0].mxu0
    %297 = vdwg.mxu0
    %v299 = vrot.slane %v295, 1
    %v302 = vadd.f32 %v218, %v295
    %v303 = vadd.f32 %v219, %v299
    %v304 = vxor.u32 %v302, 2147483648
    %v305 = vxor.u32 %v303, 2147483648
    %v306 = vmul.f32 %v304, 1.442695
    %v307 = vpow.pop %v306
    %v308 = vmul.f32 %v305, 1.442695
    %v309 = vpow.pop %v308
    %v310 = vadd.f32 %v307, 1.0
    %v311 = vadd.f32 %v309, 1.0
    %v312 = vrcp.pop %v310
    %v313 = vmul.f32 1.0, %v312
    %v314 = vrcp.pop %v311
    %v315 = vmul.f32 1.0, %v314
    %v316 = vtanh.pop %v302
    %v317 = vtanh.pop %v303
    %v318 = vmul.f32 %v313, 0.0
    %v319 = vmul.f32 %v315, 0.0
    %322 = vrot.lane.b32.xlu0 %v316, 64
    %v323 = vpop.permute.xlu0 %322
    %324 = vrot.lane.b32.xlu0 %v317, 64
    %v325 = vpop.permute.xlu0 %324
    %v328 = vmul.f32 %v313, %v323
    %v329 = vmul.f32 %v315, %v325
    %332 = vrot.lane.b32.xlu0 %v328, 32
    %v333 = vpop.permute.xlu0 %332
    %334 = vrot.lane.b32.xlu0 %v329, 32
    %v335 = vpop.permute.xlu0 %334
    %v338 = vadd.f32 %v318, %v333
    %v339 = vadd.f32 %v319, %v335
    %v340 = vtanh.pop %v338
    %v341 = vtanh.pop %v339
    %344 = vrot.lane.b32.xlu0 %v340, 64
    %v345 = vpop.permute.xlu0 %344
    %346 = vrot.lane.b32.xlu0 %v341, 64
    %v347 = vpop.permute.xlu0 %346
    %v350 = vmul.f32 %v313, %v345
    %v351 = vmul.f32 %v315, %v347
    %v352 = vtanh.pop %v350
    %v353 = vtanh.pop %v351
    %v356 = vrot.slane %v351, 7
    %vm357 = vcmask 1041409
    %v358 = vsel %vm357, %v356, %v350
    %359 = vrot.lane.b32.xlu0 %v358, 32
    %v360 = vpop.permute.xlu0 %359
    %v361 = vsel %vm224, %v360, 0
    %363 = vmatprep.subr.mxu0 0.0
    %364 = vmatpush1.msra.mxu0 %v220
    %365 = vmatprep.subr.mxu0 0.0
    %366 = vmatpush1.msra.mxu0 %v221
    %367 = vmatprep.subr.mxu0 0.0
    %368 = vmatpush1.msra.mxu0 %v222
    %369 = vmatprep.subr.mxu0 0.0
    %370 = vmatpush1.msra.mxu0 %v223
    %371 = vmatprep.subr.mxu0 0.0
    %372 = vmatpush1.msra.mxu0 0.0
    %373 = vmatprep.subr.mxu0 0.0
    %374 = vmatpush1.msra.mxu0 0.0
    %375 = vmatprep.subr.mxu0 0.0
    %376 = vmatpush1.msra.mxu0 0.0
    %377 = vmatprep.subr.mxu0 0.0
    %378 = vmatpush1.msra.mxu0 0.0
    %379 = vmatprep.subr.mxu0 0.0
    %380 = vmatpush1.msra.mxu0 0.0
    %381 = vmatprep.subr.mxu0 0.0
    %382 = vmatpush1.msra.mxu0 0.0
    %383 = vmatprep.subr.mxu0 0.0
    %384 = vmatpush1.msra.mxu0 0.0
    %385 = vmatprep.subr.mxu0 0.0
    %386 = vmatpush1.msra.mxu0 0.0
    %387 = vmatprep.subr.mxu0 0.0
    %388 = vmatpush1.msra.mxu0 0.0
    %389 = vmatprep.subr.mxu0 0.0
    %390 = vmatpush1.msra.mxu0 0.0
    %391 = vmatprep.subr.mxu0 0.0
    %392 = vmatpush1.msra.mxu0 0.0
    %393 = vmatprep.subr.mxu0 0.0
    %394 = vmatpush1.msra.mxu0 0.0
    %395 = vmatprep.subr.mxu0 0.0
    %396 = vmatpush1.msra.mxu0 0.0
    %397 = vmatprep.subr.mxu0 0.0
    %398 = vmatpush1.msra.mxu0 0.0
    %399 = vmatprep.subr.mxu0 0.0
    %400 = vmatpush1.msra.mxu0 0.0
    %401 = vmatprep.subr.mxu0 0.0
    %402 = vmatpush1.msra.mxu0 0.0
    %403 = vmatprep.subr.mxu0 0.0
    %404 = vmatpush1.msra.mxu0 0.0
    %405 = vmatprep.subr.mxu0 0.0
    %406 = vmatpush1.msra.mxu0 0.0
    %407 = vmatprep.subr.mxu0 0.0
    %408 = vmatpush1.msra.mxu0 0.0
    %409 = vmatprep.subr.mxu0 0.0
    %410 = vmatpush1.msra.mxu0 0.0
    %411 = vmatprep.subr.mxu0 0.0
    %412 = vmatpush1.msra.mxu0 0.0
    %413 = vmatprep.subr.mxu0 0.0
    %414 = vmatpush1.msra.mxu0 0.0
    %415 = vmatprep.subr.mxu0 0.0
    %416 = vmatpush1.msra.mxu0 0.0
    %417 = vmatprep.subr.mxu0 0.0
    %418 = vmatpush1.msra.mxu0 0.0
    %419 = vmatprep.subr.mxu0 0.0
    %420 = vmatpush1.msra.mxu0 0.0
    %421 = vmatprep.subr.mxu0 0.0
    %422 = vmatpush1.msra.mxu0 0.0
    %423 = vmatprep.subr.mxu0 0.0
    %424 = vmatpush1.msra.mxu0 0.0
    %425 = vmatprep.subr.mxu0 0.0
    %426 = vmatpush1.msra.mxu0 0.0
    %427 = vmatprep.mubr.f32.mxu0 0.0
    %428 = vmatmul.mubr.f32.gmra.mrb[0].mxu0 %v361
    %v429 = vpop.f32.mrb[0].mxu0
    %v430 = vadd.f32 0.0, %v429
    %v431 = vpop.f32.mrb[0].mxu0
    %432 = vdwg.mxu0
    %v434 = vrot.slane %v430, 7
    %v437 = vadd.f32 %v218, %v434
    %v438 = vadd.f32 %v219, %v430
    %v439 = vxor.u32 %v437, 2147483648
    %v440 = vxor.u32 %v438, 2147483648
    %v441 = vmul.f32 %v439, 1.442695
    %v442 = vpow.pop %v441
    %v443 = vmul.f32 %v440, 1.442695
    %v444 = vpow.pop %v443
    %v445 = vadd.f32 %v442, 1.0
    %v446 = vadd.f32 %v444, 1.0
    %v447 = vrcp.pop %v445
    %v448 = vmul.f32 1.0, %v447
    %v449 = vrcp.pop %v446
    %v450 = vmul.f32 1.0, %v449
    %v451 = vtanh.pop %v437
    %v452 = vtanh.pop %v438
    %v455 = vrot.slane %v338, 7
    %v456 = vrot.slane %v339, 7
    %v459 = vmul.f32 %v448, %v455
    %v460 = vmul.f32 %v450, %v456
    %463 = vrot.lane.b32.xlu0 %v451, 64
    %v464 = vpop.permute.xlu0 %463
    %465 = vrot.lane.b32.xlu0 %v452, 64
    %v466 = vpop.permute.xlu0 %465
    %v469 = vmul.f32 %v448, %v464
    %v470 = vmul.f32 %v450, %v466
    %473 = vrot.lane.b32.xlu0 %v469, 32
    %v474 = vpop.permute.xlu0 %473
    %475 = vrot.lane.b32.xlu0 %v470, 32
    %v476 = vpop.permute.xlu0 %475
    %v479 = vadd.f32 %v459, %v474
    %v480 = vadd.f32 %v460, %v476
    %v481 = vtanh.pop %v479
    %v482 = vtanh.pop %v480
    %485 = vrot.lane.b32.xlu0 %v481, 64
    %v486 = vpop.permute.xlu0 %485
    %487 = vrot.lane.b32.xlu0 %v482, 64
    %v488 = vpop.permute.xlu0 %487
    %v491 = vmul.f32 %v448, %v486
    %v492 = vmul.f32 %v450, %v488
    %v493 = vtanh.pop %v491
    %v494 = vtanh.pop %v492
    %v497 = vrot.slane %v491, 1
    %v498 = vsel %vm357, %v492, %v497
    %499 = vrot.lane.b32.xlu0 %v498, 32
    %v500 = vpop.permute.xlu0 %499
    %v501 = vsel %vm224, %v500, 0
    %503 = vmatprep.subr.mxu0 0.0
    %504 = vmatpush1.msra.mxu0 %v220
    %505 = vmatprep.subr.mxu0 0.0
    %506 = vmatpush1.msra.mxu0 %v221
    %507 = vmatprep.subr.mxu0 0.0
    %508 = vmatpush1.msra.mxu0 %v222
    %509 = vmatprep.subr.mxu0 0.0
    %510 = vmatpush1.msra.mxu0 %v223
    %511 = vmatprep.subr.mxu0 0.0
    %512 = vmatpush1.msra.mxu0 0.0
    %513 = vmatprep.subr.mxu0 0.0
    %514 = vmatpush1.msra.mxu0 0.0
    %515 = vmatprep.subr.mxu0 0.0
    %516 = vmatpush1.msra.mxu0 0.0
    %517 = vmatprep.subr.mxu0 0.0
    %518 = vmatpush1.msra.mxu0 0.0
    %519 = vmatprep.subr.mxu0 0.0
    %520 = vmatpush1.msra.mxu0 0.0
    %521 = vmatprep.subr.mxu0 0.0
    %522 = vmatpush1.msra.mxu0 0.0
    %523 = vmatprep.subr.mxu0 0.0
    %524 = vmatpush1.msra.mxu0 0.0
    %525 = vmatprep.subr.mxu0 0.0
    %526 = vmatpush1.msra.mxu0 0.0
    %527 = vmatprep.subr.mxu0 0.0
    %528 = vmatpush1.msra.mxu0 0.0
    %529 = vmatprep.subr.mxu0 0.0
    %530 = vmatpush1.msra.mxu0 0.0
    %531 = vmatprep.subr.mxu0 0.0
    %532 = vmatpush1.msra.mxu0 0.0
    %533 = vmatprep.subr.mxu0 0.0
    %534 = vmatpush1.msra.mxu0 0.0
    %535 = vmatprep.subr.mxu0 0.0
    %536 = vmatpush1.msra.mxu0 0.0
    %537 = vmatprep.subr.mxu0 0.0
    %538 = vmatpush1.msra.mxu0 0.0
    %539 = vmatprep.subr.mxu0 0.0
    %540 = vmatpush1.msra.mxu0 0.0
    %541 = vmatprep.subr.mxu0 0.0
    %542 = vmatpush1.msra.mxu0 0.0
    %543 = vmatprep.subr.mxu0 0.0
    %544 = vmatpush1.msra.mxu0 0.0
    %545 = vmatprep.subr.mxu0 0.0
    %546 = vmatpush1.msra.mxu0 0.0
    %547 = vmatprep.subr.mxu0 0.0
    %548 = vmatpush1.msra.mxu0 0.0
    %549 = vmatprep.subr.mxu0 0.0
    %550 = vmatpush1.msra.mxu0 0.0
    %551 = vmatprep.subr.mxu0 0.0
    %552 = vmatpush1.msra.mxu0 0.0
    %553 = vmatprep.subr.mxu0 0.0
    %554 = vmatpush1.msra.mxu0 0.0
    %555 = vmatprep.subr.mxu0 0.0
    %556 = vmatpush1.msra.mxu0 0.0
    %557 = vmatprep.subr.mxu0 0.0
    %558 = vmatpush1.msra.mxu0 0.0
    %559 = vmatprep.subr.mxu0 0.0
    %560 = vmatpush1.msra.mxu0 0.0
    %561 = vmatprep.subr.mxu0 0.0
    %562 = vmatpush1.msra.mxu0 0.0
    %563 = vmatprep.subr.mxu0 0.0
    %564 = vmatpush1.msra.mxu0 0.0
    %565 = vmatprep.subr.mxu0 0.0
    %566 = vmatpush1.msra.mxu0 0.0
    %567 = vmatprep.mubr.f32.mxu0 0.0
    %568 = vmatmul.mubr.f32.gmra.mrb[0].mxu0 %v501
    %v569 = vpop.f32.mrb[0].mxu0
    %v570 = vadd.f32 0.0, %v569
    %v571 = vpop.f32.mrb[0].mxu0
    %572 = vdwg.mxu0
    %v574 = vrot.slane %v570, 6
    %v575 = vrot.slane %v570, 7
    %v578 = vadd.f32 %v218, %v574
    %v579 = vadd.f32 %v219, %v575
    %v580 = vxor.u32 %v578, 2147483648
    %v581 = vxor.u32 %v579, 2147483648
    %v582 = vmul.f32 %v580, 1.442695
    %v583 = vpow.pop %v582
    %v584 = vmul.f32 %v581, 1.442695
    %v585 = vpow.pop %v584
    %v586 = vadd.f32 %v583, 1.0
    %v587 = vadd.f32 %v585, 1.0
    %v588 = vrcp.pop %v586
    %v589 = vmul.f32 1.0, %v588
    %v590 = vrcp.pop %v587
    %v591 = vmul.f32 1.0, %v590
    %v592 = vtanh.pop %v578
    %v593 = vtanh.pop %v579
    %v596 = vrot.slane %v479, 7
    %v597 = vrot.slane %v480, 7
    %v600 = vmul.f32 %v589, %v596
    %v601 = vmul.f32 %v591, %v597
    %604 = vrot.lane.b32.xlu0 %v592, 64
    %v605 = vpop.permute.xlu0 %604
    %606 = vrot.lane.b32.xlu0 %v593, 64
    %v607 = vpop.permute.xlu0 %606
    %v610 = vmul.f32 %v589, %v605
    %v611 = vmul.f32 %v591, %v607
    %614 = vrot.lane.b32.xlu0 %v610, 32
    %v615 = vpop.permute.xlu0 %614
    %616 = vrot.lane.b32.xlu0 %v611, 32
    %v617 = vpop.permute.xlu0 %616
    %v620 = vadd.f32 %v600, %v615
    %v621 = vadd.f32 %v601, %v617
    %v622 = vtanh.pop %v620
    %v623 = vtanh.pop %v621
    %626 = vrot.lane.b32.xlu0 %v622, 64
    %v627 = vpop.permute.xlu0 %626
    %628 = vrot.lane.b32.xlu0 %v623, 64
    %v629 = vpop.permute.xlu0 %628
    %v632 = vmul.f32 %v589, %v627
    %v633 = vmul.f32 %v591, %v629
    %v634 = vtanh.pop %v632
    %v635 = vtanh.pop %v633
    %v638 = vrot.slane %v632, 2
    %v639 = vrot.slane %v633, 1
    %v640 = vsel %vm357, %v639, %v638
    %641 = vrot.lane.b32.xlu0 %v640, 32
    %v642 = vpop.permute.xlu0 %641
    %v643 = vsel %vm224, %v642, 0
    %645 = vmatprep.subr.mxu0 0.0
    %646 = vmatpush1.msra.mxu0 %v220
    %647 = vmatprep.subr.mxu0 0.0
    %648 = vmatpush1.msra.mxu0 %v221
    %649 = vmatprep.subr.mxu0 0.0
    %650 = vmatpush1.msra.mxu0 %v222
    %651 = vmatprep.subr.mxu0 0.0
    %652 = vmatpush1.msra.mxu0 %v223
    %653 = vmatprep.subr.mxu0 0.0
    %654 = vmatpush1.msra.mxu0 0.0
    %655 = vmatprep.subr.mxu0 0.0
    %656 = vmatpush1.msra.mxu0 0.0
    %657 = vmatprep.subr.mxu0 0.0
    %658 = vmatpush1.msra.mxu0 0.0
    %659 = vmatprep.subr.mxu0 0.0
    %660 = vmatpush1.msra.mxu0 0.0
    %661 = vmatprep.subr.mxu0 0.0
    %662 = vmatpush1.msra.mxu0 0.0
    %663 = vmatprep.subr.mxu0 0.0
    %664 = vmatpush1.msra.mxu0 0.0
    %665 = vmatprep.subr.mxu0 0.0
    %666 = vmatpush1.msra.mxu0 0.0
    %667 = vmatprep.subr.mxu0 0.0
    %668 = vmatpush1.msra.mxu0 0.0
    %669 = vmatprep.subr.mxu0 0.0
    %670 = vmatpush1.msra.mxu0 0.0
    %671 = vmatprep.subr.mxu0 0.0
    %672 = vmatpush1.msra.mxu0 0.0
    %673 = vmatprep.subr.mxu0 0.0
    %674 = vmatpush1.msra.mxu0 0.0
    %675 = vmatprep.subr.mxu0 0.0
    %676 = vmatpush1.msra.mxu0 0.0
    %677 = vmatprep.subr.mxu0 0.0
    %678 = vmatpush1.msra.mxu0 0.0
    %679 = vmatprep.subr.mxu0 0.0
    %680 = vmatpush1.msra.mxu0 0.0
    %681 = vmatprep.subr.mxu0 0.0
    %682 = vmatpush1.msra.mxu0 0.0
    %683 = vmatprep.subr.mxu0 0.0
    %684 = vmatpush1.msra.mxu0 0.0
    %685 = vmatprep.subr.mxu0 0.0
    %686 = vmatpush1.msra.mxu0 0.0
    %687 = vmatprep.subr.mxu0 0.0
    %688 = vmatpush1.msra.mxu0 0.0
    %689 = vmatprep.subr.mxu0 0.0
    %690 = vmatpush1.msra.mxu0 0.0
    %691 = vmatprep.subr.mxu0 0.0
    %692 = vmatpush1.msra.mxu0 0.0
    %693 = vmatprep.subr.mxu0 0.0
    %694 = vmatpush1.msra.mxu0 0.0
    %695 = vmatprep.subr.mxu0 0.0
    %696 = vmatpush1.msra.mxu0 0.0
    %697 = vmatprep.subr.mxu0 0.0
    %698 = vmatpush1.msra.mxu0 0.0
    %699 = vmatprep.subr.mxu0 0.0
    %700 = vmatpush1.msra.mxu0 0.0
    %701 = vmatprep.subr.mxu0 0.0
    %702 = vmatpush1.msra.mxu0 0.0
    %703 = vmatprep.subr.mxu0 0.0
    %704 = vmatpush1.msra.mxu0 0.0
    %705 = vmatprep.subr.mxu0 0.0
    %706 = vmatpush1.msra.mxu0 0.0
    %707 = vmatprep.subr.mxu0 0.0
    %708 = vmatpush1.msra.mxu0 0.0
    %709 = vmatprep.mubr.f32.mxu0 0.0
    %710 = vmatmul.mubr.f32.gmra.mrb[0].mxu0 %v643
    %v711 = vpop.f32.mrb[0].mxu0
    %v712 = vadd.f32 0.0, %v711
    %v713 = vpop.f32.mrb[0].mxu0
    %714 = vdwg.mxu0
    %v716 = vrot.slane %v712, 5
    %v717 = vrot.slane %v712, 6
    %v720 = vadd.f32 %v218, %v716
    %v721 = vadd.f32 %v219, %v717
    %v722 = vxor.u32 %v720, 2147483648
    %v723 = vxor.u32 %v721, 2147483648
    %v724 = vmul.f32 %v722, 1.442695
    %v725 = vpow.pop %v724
    %v726 = vmul.f32 %v723, 1.442695
    %v727 = vpow.pop %v726
    %v728 = vadd.f32 %v725, 1.0
    %v729 = vadd.f32 %v727, 1.0
    %v730 = vrcp.pop %v728
    %v731 = vmul.f32 1.0, %v730
    %v732 = vrcp.pop %v729
    %v733 = vmul.f32 1.0, %v732
    %v734 = vtanh.pop %v720
    %v735 = vtanh.pop %v721
    %v738 = vrot.slane %v620, 7
    %v739 = vrot.slane %v621, 7
    %v742 = vmul.f32 %v731, %v738
    %v743 = vmul.f32 %v733, %v739
    %746 = vrot.lane.b32.xlu0 %v734, 64
    %v747 = vpop.permute.xlu0 %746
    %748 = vrot.lane.b32.xlu0 %v735, 64
    %v749 = vpop.permute.xlu0 %748
    %v752 = vmul.f32 %v731, %v747
    %v753 = vmul.f32 %v733, %v749
    %756 = vrot.lane.b32.xlu0 %v752, 32
    %v757 = vpop.permute.xlu0 %756
    %758 = vrot.lane.b32.xlu0 %v753, 32
    %v759 = vpop.permute.xlu0 %758
    %v762 = vadd.f32 %v742, %v757
    %v763 = vadd.f32 %v743, %v759
    %v764 = vtanh.pop %v762
    %v765 = vtanh.pop %v763
    %768 = vrot.lane.b32.xlu0 %v764, 64
    %v769 = vpop.permute.xlu0 %768
    %770 = vrot.lane.b32.xlu0 %v765, 64
    %v771 = vpop.permute.xlu0 %770
    %v774 = vmul.f32 %v731, %v769
    %v775 = vmul.f32 %v733, %v771
    %v776 = vtanh.pop %v774
    %v777 = vtanh.pop %v775
    %v780 = vrot.slane %v774, 3
    %v781 = vrot.slane %v775, 2
    %v782 = vsel %vm357, %v781, %v780
    %783 = vrot.lane.b32.xlu0 %v782, 32
    %v784 = vpop.permute.xlu0 %783
    %v785 = vsel %vm224, %v784, 0
    %787 = vmatprep.subr.mxu0 0.0
    %788 = vmatpush1.msra.mxu0 %v220
    %789 = vmatprep.subr.mxu0 0.0
    %790 = vmatpush1.msra.mxu0 %v221
    %791 = vmatprep.subr.mxu0 0.0
    %792 = vmatpush1.msra.mxu0 %v222
    %793 = vmatprep.subr.mxu0 0.0
    %794 = vmatpush1.msra.mxu0 %v223
    %795 = vmatprep.subr.mxu0 0.0
    %796 = vmatpush1.msra.mxu0 0.0
    %797 = vmatprep.subr.mxu0 0.0
    %798 = vmatpush1.msra.mxu0 0.0
    %799 = vmatprep.subr.mxu0 0.0
    %800 = vmatpush1.msra.mxu0 0.0
    %801 = vmatprep.subr.mxu0 0.0
    %802 = vmatpush1.msra.mxu0 0.0
    %803 = vmatprep.subr.mxu0 0.0
    %804 = vmatpush1.msra.mxu0 0.0
    %805 = vmatprep.subr.mxu0 0.0
    %806 = vmatpush1.msra.mxu0 0.0
    %807 = vmatprep.subr.mxu0 0.0
    %808 = vmatpush1.msra.mxu0 0.0
    %809 = vmatprep.subr.mxu0 0.0
    %810 = vmatpush1.msra.mxu0 0.0
    %811 = vmatprep.subr.mxu0 0.0
    %812 = vmatpush1.msra.mxu0 0.0
    %813 = vmatprep.subr.mxu0 0.0
    %814 = vmatpush1.msra.mxu0 0.0
    %815 = vmatprep.subr.mxu0 0.0
    %816 = vmatpush1.msra.mxu0 0.0
    %817 = vmatprep.subr.mxu0 0.0
    %818 = vmatpush1.msra.mxu0 0.0
    %819 = vmatprep.subr.mxu0 0.0
    %820 = vmatpush1.msra.mxu0 0.0
    %821 = vmatprep.subr.mxu0 0.0
    %822 = vmatpush1.msra.mxu0 0.0
    %823 = vmatprep.subr.mxu0 0.0
    %824 = vmatpush1.msra.mxu0 0.0
    %825 = vmatprep.subr.mxu0 0.0
    %826 = vmatpush1.msra.mxu0 0.0
    %827 = vmatprep.subr.mxu0 0.0
    %828 = vmatpush1.msra.mxu0 0.0
    %829 = vmatprep.subr.mxu0 0.0
    %830 = vmatpush1.msra.mxu0 0.0
    %831 = vmatprep.subr.mxu0 0.0
    %832 = vmatpush1.msra.mxu0 0.0
    %833 = vmatprep.subr.mxu0 0.0
    %834 = vmatpush1.msra.mxu0 0.0
    %835 = vmatprep.subr.mxu0 0.0
    %836 = vmatpush1.msra.mxu0 0.0
    %837 = vmatprep.subr.mxu0 0.0
    %838 = vmatpush1.msra.mxu0 0.0
    %839 = vmatprep.subr.mxu0 0.0
    %840 = vmatpush1.msra.mxu0 0.0
    %841 = vmatprep.subr.mxu0 0.0
    %842 = vmatpush1.msra.mxu0 0.0
    %843 = vmatprep.subr.mxu0 0.0
    %844 = vmatpush1.msra.mxu0 0.0
    %845 = vmatprep.subr.mxu0 0.0
    %846 = vmatpush1.msra.mxu0 0.0
    %847 = vmatprep.subr.mxu0 0.0
    %848 = vmatpush1.msra.mxu0 0.0
    %849 = vmatprep.subr.mxu0 0.0
    %850 = vmatpush1.msra.mxu0 0.0
    %851 = vmatprep.mubr.f32.mxu0 0.0
    %852 = vmatmul.mubr.f32.gmra.mrb[0].mxu0 %v785
    %v853 = vpop.f32.mrb[0].mxu0
    %v854 = vadd.f32 0.0, %v853
    %v855 = vpop.f32.mrb[0].mxu0
    %856 = vdwg.mxu0
    %v858 = vrot.slane %v854, 4
    %v859 = vrot.slane %v854, 5
    %v862 = vadd.f32 %v218, %v858
    %v863 = vadd.f32 %v219, %v859
    %v864 = vxor.u32 %v862, 2147483648
    %v865 = vxor.u32 %v863, 2147483648
    %v866 = vmul.f32 %v864, 1.442695
    %v867 = vpow.pop %v866
    %v868 = vmul.f32 %v865, 1.442695
    %v869 = vpow.pop %v868
    %v870 = vadd.f32 %v867, 1.0
    %v871 = vadd.f32 %v869, 1.0
    %v872 = vrcp.pop %v870
    %v873 = vmul.f32 1.0, %v872
    %v874 = vrcp.pop %v871
    %v875 = vmul.f32 1.0, %v874
    %v876 = vtanh.pop %v862
    %v877 = vtanh.pop %v863
    %v880 = vrot.slane %v762, 7
    %v881 = vrot.slane %v763, 7
    %v884 = vmul.f32 %v873, %v880
    %v885 = vmul.f32 %v875, %v881
    %888 = vrot.lane.b32.xlu0 %v876, 64
    %v889 = vpop.permute.xlu0 %888
    %890 = vrot.lane.b32.xlu0 %v877, 64
    %v891 = vpop.permute.xlu0 %890
    %v894 = vmul.f32 %v873, %v889
    %v895 = vmul.f32 %v875, %v891
    %898 = vrot.lane.b32.xlu0 %v894, 32
    %v899 = vpop.permute.xlu0 %898
    %900 = vrot.lane.b32.xlu0 %v895, 32
    %v901 = vpop.permute.xlu0 %900
    %v904 = vadd.f32 %v884, %v899
    %v905 = vadd.f32 %v885, %v901
    %v906 = vtanh.pop %v904
    %v907 = vtanh.pop %v905
    %910 = vrot.lane.b32.xlu0 %v906, 64
    %v911 = vpop.permute.xlu0 %910
    %912 = vrot.lane.b32.xlu0 %v907, 64
    %v913 = vpop.permute.xlu0 %912
    %v916 = vmul.f32 %v873, %v911
    %v917 = vmul.f32 %v875, %v913
    %v918 = vtanh.pop %v916
    %v919 = vtanh.pop %v917
    %v922 = vrot.slane %v916, 4
    %v923 = vrot.slane %v917, 3
    %v924 = vsel %vm357, %v923, %v922
    %925 = vrot.lane.b32.xlu0 %v924, 32
    %v926 = vpop.permute.xlu0 %925
    %v927 = vsel %vm224, %v926, 0
    %929 = vmatprep.subr.mxu0 0.0
    %930 = vmatpush1.msra.mxu0 %v220
    %931 = vmatprep.subr.mxu0 0.0
    %932 = vmatpush1.msra.mxu0 %v221
    %933 = vmatprep.subr.mxu0 0.0
    %934 = vmatpush1.msra.mxu0 %v222
    %935 = vmatprep.subr.mxu0 0.0
    %936 = vmatpush1.msra.mxu0 %v223
    %937 = vmatprep.subr.mxu0 0.0
    %938 = vmatpush1.msra.mxu0 0.0
    %939 = vmatprep.subr.mxu0 0.0
    %940 = vmatpush1.msra.mxu0 0.0
    %941 = vmatprep.subr.mxu0 0.0
    %942 = vmatpush1.msra.mxu0 0.0
    %943 = vmatprep.subr.mxu0 0.0
    %944 = vmatpush1.msra.mxu0 0.0
    %945 = vmatprep.subr.mxu0 0.0
    %946 = vmatpush1.msra.mxu0 0.0
    %947 = vmatprep.subr.mxu0 0.0
    %948 = vmatpush1.msra.mxu0 0.0
    %949 = vmatprep.subr.mxu0 0.0
    %950 = vmatpush1.msra.mxu0 0.0
    %951 = vmatprep.subr.mxu0 0.0
    %952 = vmatpush1.msra.mxu0 0.0
    %953 = vmatprep.subr.mxu0 0.0
    %954 = vmatpush1.msra.mxu0 0.0
    %955 = vmatprep.subr.mxu0 0.0
    %956 = vmatpush1.msra.mxu0 0.0
    %957 = vmatprep.subr.mxu0 0.0
    %958 = vmatpush1.msra.mxu0 0.0
    %959 = vmatprep.subr.mxu0 0.0
    %960 = vmatpush1.msra.mxu0 0.0
    %961 = vmatprep.subr.mxu0 0.0
    %962 = vmatpush1.msra.mxu0 0.0
    %963 = vmatprep.subr.mxu0 0.0
    %964 = vmatpush1.msra.mxu0 0.0
    %965 = vmatprep.subr.mxu0 0.0
    %966 = vmatpush1.msra.mxu0 0.0
    %967 = vmatprep.subr.mxu0 0.0
    %968 = vmatpush1.msra.mxu0 0.0
    %969 = vmatprep.subr.mxu0 0.0
    %970 = vmatpush1.msra.mxu0 0.0
    %971 = vmatprep.subr.mxu0 0.0
    %972 = vmatpush1.msra.mxu0 0.0
    %973 = vmatprep.subr.mxu0 0.0
    %974 = vmatpush1.msra.mxu0 0.0
    %975 = vmatprep.subr.mxu0 0.0
    %976 = vmatpush1.msra.mxu0 0.0
    %977 = vmatprep.subr.mxu0 0.0
    %978 = vmatpush1.msra.mxu0 0.0
    %979 = vmatprep.subr.mxu0 0.0
    %980 = vmatpush1.msra.mxu0 0.0
    %981 = vmatprep.subr.mxu0 0.0
    %982 = vmatpush1.msra.mxu0 0.0
    %983 = vmatprep.subr.mxu0 0.0
    %984 = vmatpush1.msra.mxu0 0.0
    %985 = vmatprep.subr.mxu0 0.0
    %986 = vmatpush1.msra.mxu0 0.0
    %987 = vmatprep.subr.mxu0 0.0
    %988 = vmatpush1.msra.mxu0 0.0
    %989 = vmatprep.subr.mxu0 0.0
    %990 = vmatpush1.msra.mxu0 0.0
    %991 = vmatprep.subr.mxu0 0.0
    %992 = vmatpush1.msra.mxu0 0.0
    %993 = vmatprep.mubr.f32.mxu0 0.0
    %994 = vmatmul.mubr.f32.gmra.mrb[0].mxu0 %v927
    %v995 = vpop.f32.mrb[0].mxu0
    %v996 = vadd.f32 0.0, %v995
    %v997 = vpop.f32.mrb[0].mxu0
    %998 = vdwg.mxu0
    %v1000 = vrot.slane %v996, 3
    %v1001 = vrot.slane %v996, 4
    %v1004 = vadd.f32 %v218, %v1000
    %v1005 = vadd.f32 %v219, %v1001
    %v1006 = vxor.u32 %v1004, 2147483648
    %v1007 = vxor.u32 %v1005, 2147483648
    %v1008 = vmul.f32 %v1006, 1.442695
    %v1009 = vpow.pop %v1008
    %v1010 = vmul.f32 %v1007, 1.442695
    %v1011 = vpow.pop %v1010
    %v1012 = vadd.f32 %v1009, 1.0
    %v1013 = vadd.f32 %v1011, 1.0
    %v1014 = vrcp.pop %v1012
    %v1015 = vmul.f32 1.0, %v1014
    %v1016 = vrcp.pop %v1013
    %v1017 = vmul.f32 1.0, %v1016
    %v1018 = vtanh.pop %v1004
    %v1019 = vtanh.pop %v1005
    %v1022 = vrot.slane %v904, 7
    %v1023 = vrot.slane %v905, 7
    %v1026 = vmul.f32 %v1015, %v1022
    %v1027 = vmul.f32 %v1017, %v1023
    %1030 = vrot.lane.b32.xlu0 %v1018, 64
    %v1031 = vpop.permute.xlu0 %1030
    %1032 = vrot.lane.b32.xlu0 %v1019, 64
    %v1033 = vpop.permute.xlu0 %1032
    %v1036 = vmul.f32 %v1015, %v1031
    %v1037 = vmul.f32 %v1017, %v1033
    %1040 = vrot.lane.b32.xlu0 %v1036, 32
    %v1041 = vpop.permute.xlu0 %1040
    %1042 = vrot.lane.b32.xlu0 %v1037, 32
    %v1043 = vpop.permute.xlu0 %1042
    %v1046 = vadd.f32 %v1026, %v1041
    %v1047 = vadd.f32 %v1027, %v1043
    %v1048 = vtanh.pop %v1046
    %v1049 = vtanh.pop %v1047
    %1052 = vrot.lane.b32.xlu0 %v1048, 64
    %v1053 = vpop.permute.xlu0 %1052
    %1054 = vrot.lane.b32.xlu0 %v1049, 64
    %v1055 = vpop.permute.xlu0 %1054
    %v1058 = vmul.f32 %v1015, %v1053
    %v1059 = vmul.f32 %v1017, %v1055
    %v1060 = vtanh.pop %v1058
    %v1061 = vtanh.pop %v1059
    %v1064 = vrot.slane %v1058, 5
    %v1065 = vrot.slane %v1059, 4
    %v1066 = vsel %vm357, %v1065, %v1064
    %1067 = vrot.lane.b32.xlu0 %v1066, 32
    %v1068 = vpop.permute.xlu0 %1067
    %v1069 = vsel %vm224, %v1068, 0
    %1071 = vmatprep.subr.mxu0 0.0
    %1072 = vmatpush1.msra.mxu0 %v220
    %1073 = vmatprep.subr.mxu0 0.0
    %1074 = vmatpush1.msra.mxu0 %v221
    %1075 = vmatprep.subr.mxu0 0.0
    %1076 = vmatpush1.msra.mxu0 %v222
    %1077 = vmatprep.subr.mxu0 0.0
    %1078 = vmatpush1.msra.mxu0 %v223
    %1079 = vmatprep.subr.mxu0 0.0
    %1080 = vmatpush1.msra.mxu0 0.0
    %1081 = vmatprep.subr.mxu0 0.0
    %1082 = vmatpush1.msra.mxu0 0.0
    %1083 = vmatprep.subr.mxu0 0.0
    %1084 = vmatpush1.msra.mxu0 0.0
    %1085 = vmatprep.subr.mxu0 0.0
    %1086 = vmatpush1.msra.mxu0 0.0
    %1087 = vmatprep.subr.mxu0 0.0
    %1088 = vmatpush1.msra.mxu0 0.0
    %1089 = vmatprep.subr.mxu0 0.0
    %1090 = vmatpush1.msra.mxu0 0.0
    %1091 = vmatprep.subr.mxu0 0.0
    %1092 = vmatpush1.msra.mxu0 0.0
    %1093 = vmatprep.subr.mxu0 0.0
    %1094 = vmatpush1.msra.mxu0 0.0
    %1095 = vmatprep.subr.mxu0 0.0
    %1096 = vmatpush1.msra.mxu0 0.0
    %1097 = vmatprep.subr.mxu0 0.0
    %1098 = vmatpush1.msra.mxu0 0.0
    %1099 = vmatprep.subr.mxu0 0.0
    %1100 = vmatpush1.msra.mxu0 0.0
    %1101 = vmatprep.subr.mxu0 0.0
    %1102 = vmatpush1.msra.mxu0 0.0
    %1103 = vmatprep.subr.mxu0 0.0
    %1104 = vmatpush1.msra.mxu0 0.0
    %1105 = vmatprep.subr.mxu0 0.0
    %1106 = vmatpush1.msra.mxu0 0.0
    %1107 = vmatprep.subr.mxu0 0.0
    %1108 = vmatpush1.msra.mxu0 0.0
    %1109 = vmatprep.subr.mxu0 0.0
    %1110 = vmatpush1.msra.mxu0 0.0
    %1111 = vmatprep.subr.mxu0 0.0
    %1112 = vmatpush1.msra.mxu0 0.0
    %1113 = vmatprep.subr.mxu0 0.0
    %1114 = vmatpush1.msra.mxu0 0.0
    %1115 = vmatprep.subr.mxu0 0.0
    %1116 = vmatpush1.msra.mxu0 0.0
    %1117 = vmatprep.subr.mxu0 0.0
    %1118 = vmatpush1.msra.mxu0 0.0
    %1119 = vmatprep.subr.mxu0 0.0
    %1120 = vmatpush1.msra.mxu0 0.0
    %1121 = vmatprep.subr.mxu0 0.0
    %1122 = vmatpush1.msra.mxu0 0.0
    %1123 = vmatprep.subr.mxu0 0.0
    %1124 = vmatpush1.msra.mxu0 0.0
    %1125 = vmatprep.subr.mxu0 0.0
    %1126 = vmatpush1.msra.mxu0 0.0
    %1127 = vmatprep.subr.mxu0 0.0
    %1128 = vmatpush1.msra.mxu0 0.0
    %1129 = vmatprep.subr.mxu0 0.0
    %1130 = vmatpush1.msra.mxu0 0.0
    %1131 = vmatprep.subr.mxu0 0.0
    %1132 = vmatpush1.msra.mxu0 0.0
    %1133 = vmatprep.subr.mxu0 0.0
    %1134 = vmatpush1.msra.mxu0 0.0
    %1135 = vmatprep.mubr.f32.mxu0 0.0
    %1136 = vmatmul.mubr.f32.gmra.mrb[0].mxu0 %v1069
    %v1137 = vpop.f32.mrb[0].mxu0
    %v1138 = vadd.f32 0.0, %v1137
    %v1139 = vpop.f32.mrb[0].mxu0
    %1140 = vdwg.mxu0
    %v1142 = vrot.slane %v1138, 2
    %v1143 = vrot.slane %v1138, 3
    %v1146 = vadd.f32 %v218, %v1142
    %v1147 = vadd.f32 %v219, %v1143
    %v1148 = vxor.u32 %v1146, 2147483648
    %v1149 = vxor.u32 %v1147, 2147483648
    %v1150 = vmul.f32 %v1148, 1.442695
    %v1151 = vpow.pop %v1150
    %v1152 = vmul.f32 %v1149, 1.442695
    %v1153 = vpow.pop %v1152
    %v1154 = vadd.f32 %v1151, 1.0
    %v1155 = vadd.f32 %v1153, 1.0
    %v1156 = vrcp.pop %v1154
    %v1157 = vmul.f32 1.0, %v1156
    %v1158 = vrcp.pop %v1155
    %v1159 = vmul.f32 1.0, %v1158
    %v1160 = vtanh.pop %v1146
    %v1161 = vtanh.pop %v1147
    %v1164 = vrot.slane %v1046, 7
    %v1165 = vrot.slane %v1047, 7
    %v1168 = vmul.f32 %v1157, %v1164
    %v1169 = vmul.f32 %v1159, %v1165
    %1172 = vrot.lane.b32.xlu0 %v1160, 64
    %v1173 = vpop.permute.xlu0 %1172
    %1174 = vrot.lane.b32.xlu0 %v1161, 64
    %v1175 = vpop.permute.xlu0 %1174
    %v1178 = vmul.f32 %v1157, %v1173
    %v1179 = vmul.f32 %v1159, %v1175
    %1182 = vrot.lane.b32.xlu0 %v1178, 32
    %v1183 = vpop.permute.xlu0 %1182
    %1184 = vrot.lane.b32.xlu0 %v1179, 32
    %v1185 = vpop.permute.xlu0 %1184
    %v1188 = vadd.f32 %v1168, %v1183
    %v1189 = vadd.f32 %v1169, %v1185
    %v1190 = vtanh.pop %v1188
    %v1191 = vtanh.pop %v1189
    %1194 = vrot.lane.b32.xlu0 %v1190, 64
    %v1195 = vpop.permute.xlu0 %1194
    %1196 = vrot.lane.b32.xlu0 %v1191, 64
    %v1197 = vpop.permute.xlu0 %1196
    %v1200 = vmul.f32 %v1157, %v1195
    %v1201 = vmul.f32 %v1159, %v1197
    %v1202 = vtanh.pop %v1200
    %v1203 = vtanh.pop %v1201
    %v1206 = vrot.slane %v1200, 6
    %v1207 = vrot.slane %v1201, 5
    %v1208 = vsel %vm357, %v1207, %v1206
    %1209 = vrot.lane.b32.xlu0 %v1208, 32
    %v1210 = vpop.permute.xlu0 %1209
    %v1211 = vsel %vm224, %v1210, 0
    %1213 = vmatprep.subr.mxu0 0.0
    %1214 = vmatpush1.msra.mxu0 %v220
    %1215 = vmatprep.subr.mxu0 0.0
    %1216 = vmatpush1.msra.mxu0 %v221
    %1217 = vmatprep.subr.mxu0 0.0
    %1218 = vmatpush1.msra.mxu0 %v222
    %1219 = vmatprep.subr.mxu0 0.0
    %1220 = vmatpush1.msra.mxu0 %v223
    %1221 = vmatprep.subr.mxu0 0.0
    %1222 = vmatpush1.msra.mxu0 0.0
    %1223 = vmatprep.subr.mxu0 0.0
    %1224 = vmatpush1.msra.mxu0 0.0
    %1225 = vmatprep.subr.mxu0 0.0
    %1226 = vmatpush1.msra.mxu0 0.0
    %1227 = vmatprep.subr.mxu0 0.0
    %1228 = vmatpush1.msra.mxu0 0.0
    %1229 = vmatprep.subr.mxu0 0.0
    %1230 = vmatpush1.msra.mxu0 0.0
    %1231 = vmatprep.subr.mxu0 0.0
    %1232 = vmatpush1.msra.mxu0 0.0
    %1233 = vmatprep.subr.mxu0 0.0
    %1234 = vmatpush1.msra.mxu0 0.0
    %1235 = vmatprep.subr.mxu0 0.0
    %1236 = vmatpush1.msra.mxu0 0.0
    %1237 = vmatprep.subr.mxu0 0.0
    %1238 = vmatpush1.msra.mxu0 0.0
    %1239 = vmatprep.subr.mxu0 0.0
    %1240 = vmatpush1.msra.mxu0 0.0
    %1241 = vmatprep.subr.mxu0 0.0
    %1242 = vmatpush1.msra.mxu0 0.0
    %1243 = vmatprep.subr.mxu0 0.0
    %1244 = vmatpush1.msra.mxu0 0.0
    %1245 = vmatprep.subr.mxu0 0.0
    %1246 = vmatpush1.msra.mxu0 0.0
    %1247 = vmatprep.subr.mxu0 0.0
    %1248 = vmatpush1.msra.mxu0 0.0
    %1249 = vmatprep.subr.mxu0 0.0
    %1250 = vmatpush1.msra.mxu0 0.0
    %1251 = vmatprep.subr.mxu0 0.0
    %1252 = vmatpush1.msra.mxu0 0.0
    %1253 = vmatprep.subr.mxu0 0.0
    %1254 = vmatpush1.msra.mxu0 0.0
    %1255 = vmatprep.subr.mxu0 0.0
    %1256 = vmatpush1.msra.mxu0 0.0
    %1257 = vmatprep.subr.mxu0 0.0
    %1258 = vmatpush1.msra.mxu0 0.0
    %1259 = vmatprep.subr.mxu0 0.0
    %1260 = vmatpush1.msra.mxu0 0.0
    %1261 = vmatprep.subr.mxu0 0.0
    %1262 = vmatpush1.msra.mxu0 0.0
    %1263 = vmatprep.subr.mxu0 0.0
    %1264 = vmatpush1.msra.mxu0 0.0
    %1265 = vmatprep.subr.mxu0 0.0
    %1266 = vmatpush1.msra.mxu0 0.0
    %1267 = vmatprep.subr.mxu0 0.0
    %1268 = vmatpush1.msra.mxu0 0.0
    %1269 = vmatprep.subr.mxu0 0.0
    %1270 = vmatpush1.msra.mxu0 0.0
    %1271 = vmatprep.subr.mxu0 0.0
    %1272 = vmatpush1.msra.mxu0 0.0
    %1273 = vmatprep.subr.mxu0 0.0
    %1274 = vmatpush1.msra.mxu0 0.0
    %1275 = vmatprep.subr.mxu0 0.0
    %1276 = vmatpush1.msra.mxu0 0.0
    %1277 = vmatprep.mubr.f32.mxu0 0.0
    %1278 = vmatmul.mubr.f32.gmra.mrb[0].mxu0 %v1211
    %v1279 = vpop.f32.mrb[0].mxu0
    %v1280 = vadd.f32 0.0, %v1279
    %v1281 = vpop.f32.mrb[0].mxu0
    %1282 = vdwg.mxu0
    %v1284 = vrot.slane %v1280, 1
    %v1285 = vrot.slane %v1280, 2
    %v1288 = vadd.f32 %v218, %v1284
    %v1289 = vadd.f32 %v219, %v1285
    %v1290 = vxor.u32 %v1288, 2147483648
    %v1291 = vxor.u32 %v1289, 2147483648
    %v1292 = vmul.f32 %v1290, 1.442695
    %v1293 = vpow.pop %v1292
    %v1294 = vmul.f32 %v1291, 1.442695
    %v1295 = vpow.pop %v1294
    %v1296 = vadd.f32 %v1293, 1.0
    %v1297 = vadd.f32 %v1295, 1.0
    %v1298 = vrcp.pop %v1296
    %v1299 = vmul.f32 1.0, %v1298
    %v1300 = vrcp.pop %v1297
    %v1301 = vmul.f32 1.0, %v1300
    %v1302 = vtanh.pop %v1288
    %v1303 = vtanh.pop %v1289
    %v1306 = vrot.slane %v1188, 7
    %v1307 = vrot.slane %v1189, 7
    %v1310 = vmul.f32 %v1299, %v1306
    %v1311 = vmul.f32 %v1301, %v1307
    %1314 = vrot.lane.b32.xlu0 %v1302, 64
    %v1315 = vpop.permute.xlu0 %1314
    %1316 = vrot.lane.b32.xlu0 %v1303, 64
    %v1317 = vpop.permute.xlu0 %1316
    %v1320 = vmul.f32 %v1299, %v1315
    %v1321 = vmul.f32 %v1301, %v1317
    %1324 = vrot.lane.b32.xlu0 %v1320, 32
    %v1325 = vpop.permute.xlu0 %1324
    %1326 = vrot.lane.b32.xlu0 %v1321, 32
    %v1327 = vpop.permute.xlu0 %1326
    %v1330 = vadd.f32 %v1310, %v1325
    %v1331 = vadd.f32 %v1311, %v1327
    %v1332 = vtanh.pop %v1330
    %v1333 = vtanh.pop %v1331
    %1336 = vrot.lane.b32.xlu0 %v1332, 64
    %v1337 = vpop.permute.xlu0 %1336
    %1338 = vrot.lane.b32.xlu0 %v1333, 64
    %v1339 = vpop.permute.xlu0 %1338
    %v1342 = vmul.f32 %v1299, %v1337
    %v1343 = vmul.f32 %v1301, %v1339
    %v1344 = vtanh.pop %v1342
    %v1345 = vtanh.pop %v1343
    %v1348 = vrot.slane %v493, 1
    %v1349 = vrot.slane %v494, 1
    %v1354 = vrot.slane %v634, 2
    %v1355 = vrot.slane %v635, 2
    %v1360 = vrot.slane %v776, 3
    %v1361 = vrot.slane %v777, 3
    %v1366 = vrot.slane %v918, 4
    %v1367 = vrot.slane %v919, 4
    %v1372 = vrot.slane %v1060, 5
    %v1373 = vrot.slane %v1061, 5
    %v1378 = vrot.slane %v1202, 6
    %v1379 = vrot.slane %v1203, 6
    %v1384 = vrot.slane %v1344, 7
    %v1385 = vrot.slane %v1345, 7
    %v1388 = vld [vmem:[%s6] sm:$0x1]
    %v1390 = vlaneseq
    %v1391 = vshrl.u32 %v1390, 7
    %v1392 = vsub.s32 0, %v1391
    %v1393 = vrot.slane %v1388, %v1392
    %1394 = vrot.lane.b32.xlu0 %v1393, 96
    %v1395 = vpop.permute.xlu0 %1394
    %v1397 = vmul.f32 %v352, %v1395
    %v1398 = vmul.f32 %v353, %v1395
    %v1399 = vmul.f32 %v1348, %v1395
    %v1400 = vmul.f32 %v1349, %v1395
    %v1401 = vmul.f32 %v1354, %v1395
    %v1402 = vmul.f32 %v1355, %v1395
    %v1403 = vmul.f32 %v1360, %v1395
    %v1404 = vmul.f32 %v1361, %v1395
    %v1405 = vmul.f32 %v1366, %v1395
    %v1406 = vmul.f32 %v1367, %v1395
    %v1407 = vmul.f32 %v1372, %v1395
    %v1408 = vmul.f32 %v1373, %v1395
    %v1409 = vmul.f32 %v1378, %v1395
    %v1410 = vmul.f32 %v1379, %v1395
    %v1411 = vmul.f32 %v1384, %v1395
    %v1412 = vmul.f32 %v1385, %v1395
    %v1429 = vrot.slane %v1398, 7
    %v1430 = vsel %vm357, %v1429, %v1397
    %v1431 = vrot.slane %v1400, 7
    %v1432 = vsel %vm357, %v1431, %v1399
    %v1433 = vrot.slane %v1402, 7
    %v1434 = vsel %vm357, %v1433, %v1401
    %v1435 = vrot.slane %v1404, 7
    %v1436 = vsel %vm357, %v1435, %v1403
    %v1437 = vrot.slane %v1406, 7
    %v1438 = vsel %vm357, %v1437, %v1405
    %v1439 = vrot.slane %v1408, 7
    %v1440 = vsel %vm357, %v1439, %v1407
    %v1441 = vrot.slane %v1410, 7
    %v1442 = vsel %vm357, %v1441, %v1409
    %v1443 = vrot.slane %v1412, 7
    %v1444 = vsel %vm357, %v1443, %v1411
    %1445 = vrot.lane.b32.xlu0 %v1430, 32
    %v1446 = vpop.permute.xlu0 %1445
    %1447 = vrot.lane.b32.xlu0 %v1432, 32
    %v1448 = vpop.permute.xlu0 %1447
    %1449 = vrot.lane.b32.xlu0 %v1434, 32
    %v1450 = vpop.permute.xlu0 %1449
    %1451 = vrot.lane.b32.xlu0 %v1436, 32
    %v1452 = vpop.permute.xlu0 %1451
    %1453 = vrot.lane.b32.xlu0 %v1438, 32
    %v1454 = vpop.permute.xlu0 %1453
    %1455 = vrot.lane.b32.xlu0 %v1440, 32
    %v1456 = vpop.permute.xlu0 %1455
    %1457 = vrot.lane.b32.xlu0 %v1442, 32
    %v1458 = vpop.permute.xlu0 %1457
    %1459 = vrot.lane.b32.xlu0 %v1444, 32
    %v1460 = vpop.permute.xlu0 %1459
    %vm1469 = vcmask 254976
    %v1470 = vsel %vm1469, %v1446, 0.0
    %1471 = vadd.xlane.f32.xlu0 %v1470
    %v1472 = vpop.xlane.xlu0 %1471
    %v1473 = vsel %vm1469, %v1448, 0.0
    %1474 = vadd.xlane.f32.xlu0 %v1473
    %v1475 = vpop.xlane.xlu0 %1474
    %v1476 = vsel %vm1469, %v1450, 0.0
    %1477 = vadd.xlane.f32.xlu0 %v1476
    %v1478 = vpop.xlane.xlu0 %1477
    %v1479 = vsel %vm1469, %v1452, 0.0
    %1480 = vadd.xlane.f32.xlu0 %v1479
    %v1481 = vpop.xlane.xlu0 %1480
    %v1482 = vsel %vm1469, %v1454, 0.0
    %1483 = vadd.xlane.f32.xlu0 %v1482
    %v1484 = vpop.xlane.xlu0 %1483
    %v1485 = vsel %vm1469, %v1456, 0.0
    %1486 = vadd.xlane.f32.xlu0 %v1485
    %v1487 = vpop.xlane.xlu0 %1486
    %v1488 = vsel %vm1469, %v1458, 0.0
    %1489 = vadd.xlane.f32.xlu0 %v1488
    %v1490 = vpop.xlane.xlu0 %1489
    %v1491 = vsel %vm1469, %v1460, 0.0
    %1492 = vadd.xlane.f32.xlu0 %v1491
    %v1493 = vpop.xlane.xlu0 %1492
    %vm1494 = vcmask 1041408
    %v1495 = vsel %vm1494, %v1472, -inf
    %v1496 = vsel %vm1494, %v1475, -inf
    %v1497 = vsel %vm1494, %v1478, -inf
    %v1498 = vsel %vm1494, %v1481, -inf
    %v1499 = vsel %vm1494, %v1484, -inf
    %v1500 = vmax.f32 %v1495, %v1499
    %v1501 = vsel %vm1494, %v1487, -inf
    %v1502 = vmax.f32 %v1496, %v1501
    %v1503 = vsel %vm1494, %v1490, -inf
    %v1504 = vmax.f32 %v1497, %v1503
    %v1505 = vsel %vm1494, %v1493, -inf
    %v1506 = vmax.f32 %v1498, %v1505
    %v1507 = vmax.f32 %v1500, %v1502
    %v1508 = vmax.f32 %v1504, %v1506
    %v1509 = vmax.f32 %v1507, %v1508
    %v1510 = vsub.f32 %v1472, %v1509
    %v1511 = vsub.f32 %v1475, %v1509
    %v1512 = vsub.f32 %v1478, %v1509
    %v1513 = vsub.f32 %v1481, %v1509
    %v1514 = vsub.f32 %v1484, %v1509
    %v1515 = vsub.f32 %v1487, %v1509
    %v1516 = vsub.f32 %v1490, %v1509
    %v1517 = vsub.f32 %v1493, %v1509
    %v1518 = vmul.f32 %v1510, 1.442695
    %v1519 = vpow.pop %v1518
    %v1520 = vmul.f32 %v1511, 1.442695
    %v1521 = vpow.pop %v1520
    %v1522 = vmul.f32 %v1512, 1.442695
    %v1523 = vpow.pop %v1522
    %v1524 = vmul.f32 %v1513, 1.442695
    %v1525 = vpow.pop %v1524
    %v1526 = vmul.f32 %v1514, 1.442695
    %v1527 = vpow.pop %v1526
    %v1528 = vmul.f32 %v1515, 1.442695
    %v1529 = vpow.pop %v1528
    %v1530 = vmul.f32 %v1516, 1.442695
    %v1531 = vpow.pop %v1530
    %v1532 = vmul.f32 %v1517, 1.442695
    %v1533 = vpow.pop %v1532
    %v1534 = vsel %vm1494, %v1519, 0.0
    %v1535 = vsel %vm1494, %v1521, 0.0
    %v1536 = vadd.f32 %v1534, %v1535
    %v1537 = vsel %vm1494, %v1523, 0.0
    %v1538 = vadd.f32 %v1536, %v1537
    %v1539 = vsel %vm1494, %v1525, 0.0
    %v1540 = vadd.f32 %v1538, %v1539
    %v1541 = vsel %vm1494, %v1527, 0.0
    %v1542 = vadd.f32 %v1540, %v1541
    %v1543 = vsel %vm1494, %v1529, 0.0
    %v1544 = vadd.f32 %v1542, %v1543
    %v1545 = vsel %vm1494, %v1531, 0.0
    %v1546 = vadd.f32 %v1544, %v1545
    %v1547 = vsel %vm1494, %v1533, 0.0
    %v1548 = vadd.f32 %v1546, %v1547
    %v1549 = vrcp.pop %v1548
    %v1550 = vmul.f32 %v1519, %v1549
    %v1551 = vmul.f32 %v1521, %v1549
    %v1552 = vmul.f32 %v1523, %v1549
    %v1553 = vmul.f32 %v1525, %v1549
    %v1554 = vmul.f32 %v1527, %v1549
    %v1555 = vmul.f32 %v1529, %v1549
    %v1556 = vmul.f32 %v1531, %v1549
    %v1557 = vmul.f32 %v1533, %v1549
    %v1560 = vrot.slane %v353, 7
    %v1561 = vsel %vm357, %v1560, %v352
    %v1562 = vrot.slane %v1349, 7
    %v1563 = vsel %vm357, %v1562, %v1348
    %v1564 = vrot.slane %v1355, 7
    %v1565 = vsel %vm357, %v1564, %v1354
    %v1566 = vrot.slane %v1361, 7
    %v1567 = vsel %vm357, %v1566, %v1360
    %v1568 = vrot.slane %v1367, 7
    %v1569 = vsel %vm357, %v1568, %v1366
    %v1570 = vrot.slane %v1373, 7
    %v1571 = vsel %vm357, %v1570, %v1372
    %v1572 = vrot.slane %v1379, 7
    %v1573 = vsel %vm357, %v1572, %v1378
    %v1574 = vrot.slane %v1385, 7
    %v1575 = vsel %vm357, %v1574, %v1384
    %1576 = vrot.lane.b32.xlu0 %v1561, 32
    %v1577 = vpop.permute.xlu0 %1576
    %1578 = vrot.lane.b32.xlu0 %v1563, 32
    %v1579 = vpop.permute.xlu0 %1578
    %1580 = vrot.lane.b32.xlu0 %v1565, 32
    %v1581 = vpop.permute.xlu0 %1580
    %1582 = vrot.lane.b32.xlu0 %v1567, 32
    %v1583 = vpop.permute.xlu0 %1582
    %1584 = vrot.lane.b32.xlu0 %v1569, 32
    %v1585 = vpop.permute.xlu0 %1584
    %1586 = vrot.lane.b32.xlu0 %v1571, 32
    %v1587 = vpop.permute.xlu0 %1586
    %1588 = vrot.lane.b32.xlu0 %v1573, 32
    %v1589 = vpop.permute.xlu0 %1588
    %1590 = vrot.lane.b32.xlu0 %v1575, 32
    %v1591 = vpop.permute.xlu0 %1590
    %v1600 = vmul.f32 %v1550, %v1577
    %v1601 = vmul.f32 %v1551, %v1579
    %v1602 = vmul.f32 %v1552, %v1581
    %v1603 = vmul.f32 %v1553, %v1583
    %v1604 = vmul.f32 %v1554, %v1585
    %v1605 = vmul.f32 %v1555, %v1587
    %v1606 = vmul.f32 %v1556, %v1589
    %v1607 = vmul.f32 %v1557, %v1591
    %v1608 = vsel %vm1469, %v1600, 0.0
    %v1609 = vsel %vm1469, %v1601, 0.0
    %v1610 = vadd.f32 %v1608, %v1609
    %v1611 = vsel %vm1469, %v1602, 0.0
    %v1612 = vadd.f32 %v1610, %v1611
    %v1613 = vsel %vm1469, %v1603, 0.0
    %v1614 = vadd.f32 %v1612, %v1613
    %v1615 = vsel %vm1469, %v1604, 0.0
    %v1616 = vadd.f32 %v1614, %v1615
    %v1617 = vsel %vm1469, %v1605, 0.0
    %v1618 = vadd.f32 %v1616, %v1617
    %v1619 = vsel %vm1469, %v1606, 0.0
    %v1620 = vadd.f32 %v1618, %v1619
    %v1621 = vsel %vm1469, %v1607, 0.0
    %v1622 = vadd.f32 %v1620, %v1621
    %v1623 = vtanh.pop %v1622
    %v1624 = vld [vmem:[%s7] sm:$0xff]
    %v1625 = vld [vmem:[%s7 + $0x8] sm:$0xff]
    %v1626 = vld [vmem:[%s7 + $0x10] sm:$0xff]
    %v1627 = vld [vmem:[%s7 + $0x18] sm:$0xff]
    %v1628 = vld [vmem:[%s8] sm:$0x1]
    %v1630 = vlaneseq
    %v1631 = vshrl.u32 %v1630, 7
    %v1632 = vsub.s32 0, %v1631
    %v1633 = vrot.slane %v1628, %v1632
    %v1636 = vsel %vm224, %v1623, 0
    %1638 = vmatprep.subr.mxu0 0.0
    %1639 = vmatpush1.msra.mxu0 %v1624
    %1640 = vmatprep.subr.mxu0 0.0
    %1641 = vmatpush1.msra.mxu0 %v1625
    %1642 = vmatprep.subr.mxu0 0.0
    %1643 = vmatpush1.msra.mxu0 %v1626
    %1644 = vmatprep.subr.mxu0 0.0
    %1645 = vmatpush1.msra.mxu0 %v1627
    %1646 = vmatprep.subr.mxu0 0.0
    %1647 = vmatpush1.msra.mxu0 0.0
    %1648 = vmatprep.subr.mxu0 0.0
    %1649 = vmatpush1.msra.mxu0 0.0
    %1650 = vmatprep.subr.mxu0 0.0
    %1651 = vmatpush1.msra.mxu0 0.0
    %1652 = vmatprep.subr.mxu0 0.0
    %1653 = vmatpush1.msra.mxu0 0.0
    %1654 = vmatprep.subr.mxu0 0.0
    %1655 = vmatpush1.msra.mxu0 0.0
    %1656 = vmatprep.subr.mxu0 0.0
    %1657 = vmatpush1.msra.mxu0 0.0
    %1658 = vmatprep.subr.mxu0 0.0
    %1659 = vmatpush1.msra.mxu0 0.0
    %1660 = vmatprep.subr.mxu0 0.0
    %1661 = vmatpush1.msra.mxu0 0.0
    %1662 = vmatprep.subr.mxu0 0.0
    %1663 = vmatpush1.msra.mxu0 0.0
    %1664 = vmatprep.subr.mxu0 0.0
    %1665 = vmatpush1.msra.mxu0 0.0
    %1666 = vmatprep.subr.mxu0 0.0
    %1667 = vmatpush1.msra.mxu0 0.0
    %1668 = vmatprep.subr.mxu0 0.0
    %1669 = vmatpush1.msra.mxu0 0.0
    %1670 = vmatprep.subr.mxu0 0.0
    %1671 = vmatpush1.msra.mxu0 0.0
    %1672 = vmatprep.subr.mxu0 0.0
    %1673 = vmatpush1.msra.mxu0 0.0
    %1674 = vmatprep.subr.mxu0 0.0
    %1675 = vmatpush1.msra.mxu0 0.0
    %1676 = vmatprep.subr.mxu0 0.0
    %1677 = vmatpush1.msra.mxu0 0.0
    %1678 = vmatprep.subr.mxu0 0.0
    %1679 = vmatpush1.msra.mxu0 0.0
    %1680 = vmatprep.subr.mxu0 0.0
    %1681 = vmatpush1.msra.mxu0 0.0
    %1682 = vmatprep.subr.mxu0 0.0
    %1683 = vmatpush1.msra.mxu0 0.0
    %1684 = vmatprep.subr.mxu0 0.0
    %1685 = vmatpush1.msra.mxu0 0.0
    %1686 = vmatprep.subr.mxu0 0.0
    %1687 = vmatpush1.msra.mxu0 0.0
    %1688 = vmatprep.subr.mxu0 0.0
    %1689 = vmatpush1.msra.mxu0 0.0
    %1690 = vmatprep.subr.mxu0 0.0
    %1691 = vmatpush1.msra.mxu0 0.0
    %1692 = vmatprep.subr.mxu0 0.0
    %1693 = vmatpush1.msra.mxu0 0.0
    %1694 = vmatprep.subr.mxu0 0.0
    %1695 = vmatpush1.msra.mxu0 0.0
    %1696 = vmatprep.subr.mxu0 0.0
    %1697 = vmatpush1.msra.mxu0 0.0
    %1698 = vmatprep.subr.mxu0 0.0
    %1699 = vmatpush1.msra.mxu0 0.0
    %1700 = vmatprep.subr.mxu0 0.0
    %1701 = vmatpush1.msra.mxu0 0.0
    %1702 = vmatprep.mubr.f32.mxu0 0.0
    %1703 = vmatmul.mubr.f32.gmra.mrb[0].mxu0 %v1636
    %v1704 = vpop.f32.mrb[0].mxu0
    %v1705 = vadd.f32 %v1633, %v1704
    %v1706 = vpop.f32.mrb[0].mxu0
    %1707 = vdwg.mxu0
    %vm1708 = vcmask 33792
    %1709 = vst.msk [vmem:[#allocation2] sm:$0x3] %vm1708, %v1705
    // Predicated region
    $region38: #{tpu_custom_call.1} parent=1 // pred_check
      _
    $region39: #{tpu_custom_call.1} parent=1 // pred_check_branch
      %1711 = sbr.rel (0) target = $region41
    $region40: #{tpu_custom_call.1} parent=1 // pred_region
      %s1713 = ssub.s32 32, 32
      %1714 = vsyncadd [#allocation3], %s1713
      %s1716 = sshll.u32 [#allocation2], 4
      %s1717 = int_to_ptr.vmem [resolvable:$true] %s1716
      %1719 = dma.vmem_to_hbm [thread:$0]  %s1717, 32, %s9, [#allocation3]
    $region41: #{tpu_custom_call.1} parent=1 // pred_fallthru
      _
    // Predicated region
    $region42: #{tpu_custom_call.1} parent=1 // pred_check
      _
    $region43: #{tpu_custom_call.1} parent=1 // pred_check_branch
      %1721 = sbr.rel (0) target = $region45
    $region44: #{tpu_custom_call.1} parent=1 // pred_region
      %1722 = dma.done [#allocation3], 32
    $region45: #{tpu_custom_call.1} parent=1 // pred_fallthru
      _
    %1723 = vsyncpa [#allocation3], 1

</llo_original>
